<compile_context>
chip_gen: v6e
topology: v6e:2x2x1
jax: 0.10.0
libtpu: 0.0.40
codegen_flags: <defaults>
</compile_context>

<pallas_src>
import jax
import jax.numpy as jnp
from jax import lax
from jax.experimental import pallas as pl
from jax.experimental.pallas import tpu as pltpu

NEG_SLOPE = 0.1  # supar MLP = Linear -> LeakyReLU(0.1) -> (shared) dropout


def _round_up(x, m):
    return (x + m - 1) // m * m


def _biaffine_dep_kernel(
    x_ref, mask_ref,
    w_all_ref, b_all_ref,          # fused, lane-aligned MLP weights (E, Ntot) bf16 / bias f32
    arc_w_ref, arc_bx_ref,         # arc biaffine core (Nap, Nap) bf16 / head bias row (1, Nap) f32
    relw_ref,                      # rel weights for this relation block (Nrp, Rt*Nrp) bf16
    s_arc_ref, s_rel_ref,
    rel_d_s, rel_h_s,              # bf16 VMEM scratch, persists across the R-block sweep
):
    rb = pl.program_id(1)
    nap = arc_w_ref.shape[0]
    nrp = rel_d_s.shape[1]         # padded [rel ; 1 ; 0...] width (multiple of 128)
    rt = s_rel_ref.shape[1]        # relations per grid step

    @pl.when(rb == 0)
    def _():
        x = x_ref[0]                                               # (S, E) bf16

        # ---- fused MLPs: one lane-dense bf16 MXU matmul for all four projections
        h = jnp.dot(x, w_all_ref[...], preferred_element_type=jnp.float32)
        h = h + b_all_ref[...]
        h = jnp.where(h > 0, h, NEG_SLOPE * h)                     # LeakyReLU(0.1), f32 VPU

        # All segment boundaries are multiples of 128 -> tile-aligned slices (no relayout).
        arc_d = h[:, :nap].astype(jnp.bfloat16)
        arc_h = h[:, nap:2 * nap].astype(jnp.bfloat16)
        # rel segments already contain the biaffine "ones" column (bias-only column == 1
        # after LeakyReLU) and zero padding, so they are the ones-augmented activations.
        rel_d_s[...] = h[:, 2 * nap:2 * nap + nrp].astype(jnp.bfloat16)
        rel_h_s[...] = h[:, 2 * nap + nrp:2 * nap + 2 * nrp].astype(jnp.bfloat16)

        # ---- arc biaffine (bias_x only, scale=0): head-side bias folded into t
        t = jnp.dot(arc_d, arc_w_ref[...], preferred_element_type=jnp.float32)
        t = (t + arc_bx_ref[...]).astype(jnp.bfloat16)             # (S, Nap)
        s_arc = lax.dot_general(t, arc_h, (((1,), (1,)), ((), ())),
                                preferred_element_type=jnp.float32)  # (S, S)
        m = mask_ref[0]                                            # (1, S): 1=token, 0=pad
        # masked_fill_(~mask.unsqueeze(1), -inf): mask the head (column) axis.
        s_arc_ref[0] = jnp.where(m > 0.0, s_arc, -jnp.inf)

    # ---- rel biaffine for this block of Rt relations:
    # one wide core matmul (S, Nrp) @ (Nrp, Rt*Nrp), then Rt lane-aligned (S,Nrp)@(Nrp,S).
    core = jnp.dot(rel_d_s[...], relw_ref[...],
                   preferred_element_type=jnp.float32).astype(jnp.bfloat16)  # (S, Rt*Nrp)
    rel_h = rel_h_s[...]                                           # (S, Nrp) bf16
    for t_idx in range(rt):                                        # static, small unroll
        core_t = core[:, t_idx * nrp:(t_idx + 1) * nrp]            # static, 128-aligned slice
        s = lax.dot_general(core_t, rel_h, (((1,), (1,)), ((), ())),
                            preferred_element_type=jnp.float32)    # (S, S)
        s_rel_ref[0, t_idx] = s.astype(s_rel_ref.dtype)            # bf16, lane-dense store


def biaffine_forward(params, x, words, pad_index=-1, rel_block=4):
    """Returns (s_arc f32 (B,S,S), s_rel bf16 boxy (B,R,S,S), mask bool (B,S))."""
    B, S, E = x.shape
    assert E == params["n_embed"], "Check if size of encoding is correct"
    Nap = params["arc_W"].shape[0]
    Nrp = params["nrp"]
    R = params["n_rels"]
    Ntot = params["w_all"].shape[1]

    # Relations per grid step; must divide R (fall back to the largest divisor <= rel_block).
    Rt = max(1, min(rel_block, R))
    while R % Rt:
        Rt -= 1

    mask = (words != pad_index) if words.ndim < 3 else (words != pad_index).any(-1)  # (B, S)
    mask_f = mask.astype(jnp.float32).reshape(B, 1, S)

    # NOTE: the rb (relation-block) grid axis MUST stay "arbitrary" and iterate from 0 for
    # each b: rel_d_s / rel_h_s / s_arc are produced at rb==0 and reused for rb>0.
    # NOTE: for real workloads pad S to a multiple of 128 (lane-dense stores); here the
    # blocks span the full S so correctness does not require padding.
    s_arc, s_rel_boxy = pl.pallas_call(
        _biaffine_dep_kernel,
        grid=(B, R // Rt),
        in_specs=[
            pl.BlockSpec((1, S, E), lambda b, r: (b, 0, 0)),        # x (bf16)
            pl.BlockSpec((1, 1, S), lambda b, r: (b, 0, 0)),        # mask
            pl.BlockSpec((E, Ntot), lambda b, r: (0, 0)),           # fused MLP weight
            pl.BlockSpec((1, Ntot), lambda b, r: (0, 0)),           # fused MLP bias
            pl.BlockSpec((Nap, Nap), lambda b, r: (0, 0)),          # arc core weight
            pl.BlockSpec((1, Nap), lambda b, r: (0, 0)),            # arc head-bias row
            pl.BlockSpec((Nrp, Rt * Nrp), lambda b, r: (0, r)),     # Rt relation weights/step
        ],
        out_specs=[
            pl.BlockSpec((1, S, S), lambda b, r: (b, 0, 0)),        # s_arc (resident over r)
            pl.BlockSpec((1, Rt, S, S), lambda b, r: (b, r, 0, 0)), # s_rel, boxy bf16
        ],
        out_shape=[
            jax.ShapeDtypeStruct((B, S, S), jnp.float32),
            jax.ShapeDtypeStruct((B, R, S, S), jnp.bfloat16),
        ],
        scratch_shapes=[
            pltpu.VMEM((S, Nrp), jnp.bfloat16),   # [rel_d ; 1 ; 0-pad]
            pltpu.VMEM((S, Nrp), jnp.bfloat16),   # [rel_h ; 1 ; 0-pad]
        ],
        compiler_params=pltpu.CompilerParams(
            dimension_semantics=("parallel", "arbitrary"),
            vmem_limit_bytes=48 * 1024 * 1024),
    )(x.astype(jnp.bfloat16), mask_f,
      params["w_all"], params["b_all"],
      params["arc_W"], params["arc_bx"],
      params["relw_packed"])

    return s_arc, s_rel_boxy, mask


def rel_scores_to_module_layout(s_rel_boxy):
    # Exact module contract: s_rel.permute(0, 2, 3, 1) -> (B, S, S, n_rels), f32.
    # Costs a full HBM round-trip of the largest tensor; avoid it in hot paths.
    return jnp.transpose(s_rel_boxy.astype(jnp.float32), (0, 2, 3, 1))


def init_params(key, n_embed, n_arc_mlp, n_rel_mlp, n_rels):
    ks = jax.random.split(key, 6)

    def linear(k, n_in, n_out):
        # torch.nn.Linear weight is (n_out, n_in); store it pre-transposed (n_in, n_out).
        w = (jax.random.normal(k, (n_out, n_in), jnp.float32) / jnp.sqrt(n_in)).T
        b = jnp.zeros((1, n_out), jnp.float32)
        return w, b

    w_arc_d, b_arc_d = linear(ks[0], n_embed, n_arc_mlp)
    w_arc_h, b_arc_h = linear(ks[1], n_embed, n_arc_mlp)
    w_rel_d, b_rel_d = linear(ks[2], n_embed, n_rel_mlp)
    w_rel_h, b_rel_h = linear(ks[3], n_embed, n_rel_mlp)

    # Biaffine arc: weight (1, n_arc+1, n_arc), bias_x=True, bias_y=False, scale=0.
    arc_full = jax.random.normal(ks[4], (1, n_arc_mlp + 1, n_arc_mlp), jnp.float32) * 0.05
    # Biaffine rel: weight (n_rels, n_rel+1, n_rel+1), bias_x=bias_y=True.
    rel_full = jax.random.normal(ks[5], (n_rels, n_rel_mlp + 1, n_rel_mlp + 1), jnp.float32) * 0.05

    Na, Nr = n_arc_mlp, n_rel_mlp
    Nr1 = Nr + 1
    Nap = _round_up(Na, 128)        # lane-aligned arc segment width
    Nrp = _round_up(Nr1, 128)       # lane-aligned [rel ; 1 ; 0-pad] segment width

    def pad_cols(w, b, width, ones_col=None):
        e, n = w.shape
        wp = jnp.zeros((e, width), jnp.float32).at[:, :n].set(w)
        bp = jnp.zeros((1, width), jnp.float32).at[:, :n].set(b)
        if ones_col is not None:
            bp = bp.at[0, ones_col].set(1.0)    # bias-only column -> LeakyReLU(1) = 1
        return wp, bp

    wad, bad = pad_cols(w_arc_d, b_arc_d, Nap)
    wah, bah = pad_cols(w_arc_h, b_arc_h, Nap)
    wrd, brd = pad_cols(w_rel_d, b_rel_d, Nrp, ones_col=Nr)
    wrh, brh = pad_cols(w_rel_h, b_rel_h, Nrp, ones_col=Nr)

    # ---- kernel-side packed / bf16 parameters (prepared once, host side)
    w_all = jnp.concatenate([wad, wah, wrd, wrh], axis=1).astype(jnp.bfloat16)
    b_all = jnp.concatenate([bad, bah, brd, brh], axis=1)                        # f32

    arc_W = (jnp.zeros((Nap, Nap), jnp.float32)
             .at[:Na, :Na].set(arc_full[0, :Na, :])).astype(jnp.bfloat16)        # (Nap, Nap)
    arc_bx = jnp.zeros((1, Nap), jnp.float32).at[:, :Na].set(arc_full[0, Na:, :])  # (1, Nap) f32

    # rel weights padded to (R, Nrp, Nrp) then packed as (Nrp, R*Nrp) so that
    # relw_packed[:, o*Nrp:(o+1)*Nrp] == W_pad[o].
    relw_pad = jnp.zeros((n_rels, Nrp, Nrp), jnp.float32).at[:, :Nr1, :Nr1].set(rel_full)
    relw_packed = jnp.transpose(relw_pad, (1, 0, 2)).reshape(Nrp, n_rels * Nrp).astype(jnp.bfloat16)

    return dict(
        n_embed=n_embed, n_rels=n_rels, nrp=Nrp,
        # packed kernel params
        w_all=w_all, b_all=b_all, arc_W=arc_W, arc_bx=arc_bx, relw_packed=relw_packed,
        # f32 originals, used only by the pure-JAX reference check
        w_arc_d=w_arc_d, b_arc_d=b_arc_d, w_arc_h=w_arc_h, b_arc_h=b_arc_h,
        w_rel_d=w_rel_d, b_rel_d=b_rel_d, w_rel_h=w_rel_h, b_rel_h=b_rel_h,
        arc_full=arc_full, rel_full=rel_full,
    )


def reference_forward(params, x, words, pad_index=-1):
    # Pure-f32 reference matching the PyTorch module math (module output layout).
    def mlp(w, b):
        h = x @ w + b
        return jnp.where(h > 0, h, NEG_SLOPE * h)

    arc_d = mlp(params["w_arc_d"], params["b_arc_d"])
    arc_h = mlp(params["w_arc_h"], params["b_arc_h"])
    rel_d = mlp(params["w_rel_d"], params["b_rel_d"])
    rel_h = mlp(params["w_rel_h"], params["b_rel_h"])

    ones = lambda a: jnp.concatenate([a, jnp.ones_like(a[..., :1])], axis=-1)
    mask = words != pad_index
    s_arc = jnp.einsum("bxi,oij,byj->boxy", ones(arc_d), params["arc_full"], arc_h)[:, 0]
    s_arc = jnp.where(mask[:, None, :], s_arc, -jnp.inf)
    s_rel = jnp.einsum("bxi,oij,byj->boxy", ones(rel_d), params["rel_full"], ones(rel_h))
    return s_arc, jnp.transpose(s_rel, (0, 2, 3, 1)), mask


if __name__ == "__main__":
    B, S = 2, 8
    n_words, n_pos, n_rels = 100, 20, 8
    lstm_hidden_size = 32
    n_embed = 2 * lstm_hidden_size          # encoder == 'lstm', typological=False
    n_arc_mlp, n_rel_mlp = 128, 32
    pad_index = -1

    key = jax.random.PRNGKey(0)
    k_x, k_w, k_p = jax.random.split(key, 3)

    x = jax.random.normal(k_x, (B, S, n_embed), jnp.float32)        # encoder output (see TODO)
    words = jax.random.randint(k_w, (B, S), 1, n_words).astype(jnp.int32)
    words = words.at[1, 6:].set(pad_index)                          # pad tail of sentence 1

    params = init_params(k_p, n_embed, n_arc_mlp, n_rel_mlp, n_rels)

    s_arc, s_rel_boxy, mask = biaffine_forward(params, x, words, pad_index)
    jax.block_until_ready((s_arc, s_rel_boxy, mask))

    assert s_arc.shape == (B, S, S)
    assert s_rel_boxy.shape == (B, n_rels, S, S) and s_rel_boxy.dtype == jnp.bfloat16
    assert mask.shape == (B, S)

    ref_arc, ref_rel, ref_mask = reference_forward(params, x, words, pad_index)
    assert bool(jnp.all(mask == ref_mask))
    # Kernel runs the MXU in bf16 (f32 accumulation) and stores s_rel in bf16, so compare
    # against the f32 reference with bf16-appropriate tolerances
    # (values: |s_arc| ~ O(10), |s_rel| ~ O(2)).
    assert bool(jnp.allclose(s_arc, ref_arc, atol=0.5, rtol=5e-2))
    s_rel_module = rel_scores_to_module_layout(s_rel_boxy)          # (B, S, S, R) f32, test only
    assert s_rel_module.shape == (B, S, S, n_rels)
    assert bool(jnp.allclose(s_rel_module, ref_rel, atol=0.25, rtol=5e-2))

    print("KERNEL_OK")
</pallas_src>

<mosaic_0001>
module attributes {stable_mosaic.version = 11 : i64} {
  func.func @_biaffine_dep_kernel(%arg0: i32, %arg1: i32, %arg2: memref<1x8x64xbf16, #tpu.memory_space<vmem>>, %arg3: memref<1x1x8xf32, #tpu.memory_space<vmem>>, %arg4: memref<64x512xbf16, #tpu.memory_space<vmem>>, %arg5: memref<1x512xf32, #tpu.memory_space<vmem>>, %arg6: memref<128x128xbf16, #tpu.memory_space<vmem>>, %arg7: memref<1x128xf32, #tpu.memory_space<vmem>>, %arg8: memref<128x512xbf16, #tpu.memory_space<vmem>>, %arg9: memref<1x8x8xf32, #tpu.memory_space<vmem>>, %arg10: memref<1x4x8x8xbf16, #tpu.memory_space<vmem>>, %arg11: memref<8x128xbf16, #tpu.memory_space<vmem>>, %arg12: memref<8x128xbf16, #tpu.memory_space<vmem>>) attributes {dimension_semantics = [#tpu.dimension_semantics<parallel>, #tpu.dimension_semantics<arbitrary>], iteration_bounds = array<i64: 2, 2>, scalar_prefetch = 0 : i64, scratch_operands = 2 : i64, tpu.core_type = #tpu.core_type<tc>, window_params = [{transform_indices = @transform_0, window_bounds = array<i64: 1, 8, 64>}, {transform_indices = @transform_1, window_bounds = array<i64: 1, 1, 8>}, {pipeline_mode = #tpu.pipeline_mode<synchronous>, transform_indices = @transform_2, window_bounds = array<i64: 64, 512>}, {pipeline_mode = #tpu.pipeline_mode<synchronous>, transform_indices = @transform_3, window_bounds = array<i64: 1, 512>}, {pipeline_mode = #tpu.pipeline_mode<synchronous>, transform_indices = @transform_4, window_bounds = array<i64: 128, 128>}, {pipeline_mode = #tpu.pipeline_mode<synchronous>, transform_indices = @transform_5, window_bounds = array<i64: 1, 128>}, {transform_indices = @transform_6, window_bounds = array<i64: 128, 512>}, {transform_indices = @transform_7, window_bounds = array<i64: 1, 8, 8>}, {transform_indices = @transform_8, window_bounds = array<i64: 1, 4, 8, 8>}]} {
    %c0_i32 = arith.constant 0 : i32
    %0 = arith.cmpi eq, %arg1, %c0_i32 : i32
    %1 = arith.extui %0 : i1 to i32
    %c0_i32_0 = arith.constant 0 : i32
    %2 = arith.cmpi ne, %1, %c0_i32_0 : i32
    scf.if %2 {
      %c0_23 = arith.constant 0 : index
      %c0_24 = arith.constant 0 : index
      %c0_25 = arith.constant 0 : index
      %32 = vector.load %arg2[%c0_23, %c0_24, %c0_25] : memref<1x8x64xbf16, #tpu.memory_space<vmem>>, vector<1x8x64xbf16>
      %33 = vector.shape_cast %32 : vector<1x8x64xbf16> to vector<8x64xbf16>
      %c0_26 = arith.constant 0 : index
      %c0_27 = arith.constant 0 : index
      %34 = vector.load %arg4[%c0_26, %c0_27] : memref<64x512xbf16, #tpu.memory_space<vmem>>, vector<64x512xbf16>
      %cst_28 = arith.constant dense<0.000000e+00> : vector<8x512xf32>
      %35 = tpu.matmul %33, %34, %cst_28 {dimension_numbers = #tpu.dot_dimension_numbers<[1], [0], [0], [1], [0, 0, 1, 1], [], []>} : vector<8x64xbf16>, vector<64x512xbf16>, vector<8x512xf32> -> vector<8x512xf32>
      %c0_29 = arith.constant 0 : index
      %c0_30 = arith.constant 0 : index
      %36 = vector.load %arg5[%c0_29, %c0_30] : memref<1x512xf32, #tpu.memory_space<vmem>>, vector<1x512xf32>
      %37 = vector.broadcast %36 : vector<1x512xf32> to vector<8x512xf32>
      %38 = arith.addf %35, %37 : vector<8x512xf32>
      %cst_31 = arith.constant 0.000000e+00 : f32
      %39 = vector.broadcast %cst_31 : f32 to vector<8x512xf32>
      %40 = arith.cmpf ogt, %38, %39 : vector<8x512xf32>
      %cst_32 = arith.constant 1.000000e-01 : f32
      %41 = vector.broadcast %cst_32 : f32 to vector<8x512xf32>
      %42 = arith.mulf %41, %38 : vector<8x512xf32>
      %43 = arith.select %40, %38, %42 : vector<8x512xi1>, vector<8x512xf32>
      %44 = vector.extract_strided_slice %43 {offsets = [0, 0], sizes = [8, 128], strides = [1, 1]} : vector<8x512xf32> to vector<8x128xf32>
      %45 = arith.truncf %44 : vector<8x128xf32> to vector<8x128xbf16>
      %46 = vector.extract_strided_slice %43 {offsets = [0, 128], sizes = [8, 128], strides = [1, 1]} : vector<8x512xf32> to vector<8x128xf32>
      %47 = arith.truncf %46 : vector<8x128xf32> to vector<8x128xbf16>
      %48 = vector.extract_strided_slice %43 {offsets = [0, 256], sizes = [8, 128], strides = [1, 1]} : vector<8x512xf32> to vector<8x128xf32>
      %49 = arith.truncf %48 : vector<8x128xf32> to vector<8x128xbf16>
      %c0_33 = arith.constant 0 : index
      %c0_34 = arith.constant 0 : index
      %50 = vector.load %arg11[%c0_33, %c0_34] : memref<8x128xbf16, #tpu.memory_space<vmem>>, vector<8x128xbf16>
      tpu.vector_store %arg11[%c0_33, %c0_34], %49 {strides = array<i32>} : memref<8x128xbf16, #tpu.memory_space<vmem>>, vector<8x128xbf16>,
      %51 = vector.extract_strided_slice %43 {offsets = [0, 384], sizes = [8, 128], strides = [1, 1]} : vector<8x512xf32> to vector<8x128xf32>
      %52 = arith.truncf %51 : vector<8x128xf32> to vector<8x128xbf16>
      %c0_35 = arith.constant 0 : index
      %c0_36 = arith.constant 0 : index
      %53 = vector.load %arg12[%c0_35, %c0_36] : memref<8x128xbf16, #tpu.memory_space<vmem>>, vector<8x128xbf16>
      tpu.vector_store %arg12[%c0_35, %c0_36], %52 {strides = array<i32>} : memref<8x128xbf16, #tpu.memory_space<vmem>>, vector<8x128xbf16>,
      %c0_37 = arith.constant 0 : index
      %c0_38 = arith.constant 0 : index
      %54 = vector.load %arg6[%c0_37, %c0_38] : memref<128x128xbf16, #tpu.memory_space<vmem>>, vector<128x128xbf16>
      %cst_39 = arith.constant dense<0.000000e+00> : vector<8x128xf32>
      %55 = tpu.matmul %45, %54, %cst_39 {dimension_numbers = #tpu.dot_dimension_numbers<[1], [0], [0], [1], [0, 0, 1, 1], [], []>} : vector<8x128xbf16>, vector<128x128xbf16>, vector<8x128xf32> -> vector<8x128xf32>
      %c0_40 = arith.constant 0 : index
      %c0_41 = arith.constant 0 : index
      %56 = vector.load %arg7[%c0_40, %c0_41] : memref<1x128xf32, #tpu.memory_space<vmem>>, vector<1x128xf32>
      %57 = vector.broadcast %56 : vector<1x128xf32> to vector<8x128xf32>
      %58 = arith.addf %55, %57 : vector<8x128xf32>
      %59 = arith.truncf %58 : vector<8x128xf32> to vector<8x128xbf16>
      %cst_42 = arith.constant dense<0.000000e+00> : vector<8x8xf32>
      %60 = tpu.matmul %59, %47, %cst_42 {dimension_numbers = #tpu.dot_dimension_numbers<[1], [1], [0], [0], [0, 0, 1, 0], [], []>} : vector<8x128xbf16>, vector<8x128xbf16>, vector<8x8xf32> -> vector<8x8xf32>
      %c0_43 = arith.constant 0 : index
      %c0_44 = arith.constant 0 : index
      %c0_45 = arith.constant 0 : index
      %61 = vector.load %arg3[%c0_43, %c0_44, %c0_45] : memref<1x1x8xf32, #tpu.memory_space<vmem>>, vector<1x1x8xf32>
      %62 = vector.shape_cast %61 : vector<1x1x8xf32> to vector<1x8xf32>
      %cst_46 = arith.constant 0.000000e+00 : f32
      %63 = vector.broadcast %cst_46 : f32 to vector<1x8xf32>
      %64 = arith.cmpf ogt, %62, %63 : vector<1x8xf32>
      %cst_47 = arith.constant 0xFF800000 : f32
      %65 = vector.shape_cast %64 : vector<1x8xi1> to vector<1x8xi1>
      %66 = vector.broadcast %65 : vector<1x8xi1> to vector<8x8xi1>
      %67 = vector.broadcast %cst_47 : f32 to vector<8x8xf32>
      %68 = arith.select %66, %60, %67 : vector<8x8xi1>, vector<8x8xf32>
      %c0_48 = arith.constant 0 : index
      %c0_49 = arith.constant 0 : index
      %c0_50 = arith.constant 0 : index
      %69 = vector.load %arg9[%c0_48, %c0_49, %c0_50] : memref<1x8x8xf32, #tpu.memory_space<vmem>>, vector<1x8x8xf32>
      %70 = vector.shape_cast %69 : vector<1x8x8xf32> to vector<8x8xf32>
      %71 = vector.shape_cast %68 : vector<8x8xf32> to vector<1x8x8xf32>
      tpu.vector_store %arg9[%c0_48, %c0_49, %c0_50], %71 {strides = array<i32>} : memref<1x8x8xf32, #tpu.memory_space<vmem>>, vector<1x8x8xf32>,
    } else {
    }
    %c0 = arith.constant 0 : index
    %c0_1 = arith.constant 0 : index
    %3 = vector.load %arg11[%c0, %c0_1] : memref<8x128xbf16, #tpu.memory_space<vmem>>, vector<8x128xbf16>
    %c0_2 = arith.constant 0 : index
    %c0_3 = arith.constant 0 : index
    %4 = vector.load %arg8[%c0_2, %c0_3] : memref<128x512xbf16, #tpu.memory_space<vmem>>, vector<128x512xbf16>
    %cst = arith.constant dense<0.000000e+00> : vector<8x512xf32>
    %5 = tpu.matmul %3, %4, %cst {dimension_numbers = #tpu.dot_dimension_numbers<[1], [0], [0], [1], [0, 0, 1, 1], [], []>} : vector<8x128xbf16>, vector<128x512xbf16>, vector<8x512xf32> -> vector<8x512xf32>
    %6 = arith.truncf %5 : vector<8x512xf32> to vector<8x512xbf16>
    %c0_4 = arith.constant 0 : index
    %c0_5 = arith.constant 0 : index
    %7 = vector.load %arg12[%c0_4, %c0_5] : memref<8x128xbf16, #tpu.memory_space<vmem>>, vector<8x128xbf16>
    %8 = vector.extract_strided_slice %6 {offsets = [0, 0], sizes = [8, 128], strides = [1, 1]} : vector<8x512xbf16> to vector<8x128xbf16>
    %cst_6 = arith.constant dense<0.000000e+00> : vector<8x8xf32>
    %9 = tpu.matmul %8, %7, %cst_6 {dimension_numbers = #tpu.dot_dimension_numbers<[1], [1], [0], [0], [0, 0, 1, 0], [], []>} : vector<8x128xbf16>, vector<8x128xbf16>, vector<8x8xf32> -> vector<8x8xf32>
    %10 = arith.truncf %9 : vector<8x8xf32> to vector<8x8xbf16>
    %c0_7 = arith.constant 0 : index
    %c0_8 = arith.constant 0 : index
    %c0_9 = arith.constant 0 : index
    %c0_10 = arith.constant 0 : index
    %11 = vector.load %arg10[%c0_7, %c0_8, %c0_9, %c0_10] : memref<1x4x8x8xbf16, #tpu.memory_space<vmem>>, vector<1x1x8x8xbf16>
    %12 = vector.shape_cast %11 : vector<1x1x8x8xbf16> to vector<8x8xbf16>
    %13 = vector.shape_cast %10 : vector<8x8xbf16> to vector<1x1x8x8xbf16>
    tpu.vector_store %arg10[%c0_7, %c0_8, %c0_9, %c0_10], %13 {strides = array<i32>} : memref<1x4x8x8xbf16, #tpu.memory_space<vmem>>, vector<1x1x8x8xbf16>,
    %14 = vector.extract_strided_slice %6 {offsets = [0, 128], sizes = [8, 128], strides = [1, 1]} : vector<8x512xbf16> to vector<8x128xbf16>
    %cst_11 = arith.constant dense<0.000000e+00> : vector<8x8xf32>
    %15 = tpu.matmul %14, %7, %cst_11 {dimension_numbers = #tpu.dot_dimension_numbers<[1], [1], [0], [0], [0, 0, 1, 0], [], []>} : vector<8x128xbf16>, vector<8x128xbf16>, vector<8x8xf32> -> vector<8x8xf32>
    %16 = arith.truncf %15 : vector<8x8xf32> to vector<8x8xbf16>
    %c0_12 = arith.constant 0 : index
    %c1 = arith.constant 1 : index
    %c0_13 = arith.constant 0 : index
    %c0_14 = arith.constant 0 : index
    %17 = vector.load %arg10[%c0_12, %c1, %c0_13, %c0_14] : memref<1x4x8x8xbf16, #tpu.memory_space<vmem>>, vector<1x1x8x8xbf16>
    %18 = vector.shape_cast %17 : vector<1x1x8x8xbf16> to vector<8x8xbf16>
    %19 = vector.shape_cast %16 : vector<8x8xbf16> to vector<1x1x8x8xbf16>
    tpu.vector_store %arg10[%c0_12, %c1, %c0_13, %c0_14], %19 {strides = array<i32>} : memref<1x4x8x8xbf16, #tpu.memory_space<vmem>>, vector<1x1x8x8xbf16>,
    %20 = vector.extract_strided_slice %6 {offsets = [0, 256], sizes = [8, 128], strides = [1, 1]} : vector<8x512xbf16> to vector<8x128xbf16>
    %cst_15 = arith.constant dense<0.000000e+00> : vector<8x8xf32>
    %21 = tpu.matmul %20, %7, %cst_15 {dimension_numbers = #tpu.dot_dimension_numbers<[1], [1], [0], [0], [0, 0, 1, 0], [], []>} : vector<8x128xbf16>, vector<8x128xbf16>, vector<8x8xf32> -> vector<8x8xf32>
    %22 = arith.truncf %21 : vector<8x8xf32> to vector<8x8xbf16>
    %c0_16 = arith.constant 0 : index
    %c2 = arith.constant 2 : index
    %c0_17 = arith.constant 0 : index
    %c0_18 = arith.constant 0 : index
    %23 = vector.load %arg10[%c0_16, %c2, %c0_17, %c0_18] : memref<1x4x8x8xbf16, #tpu.memory_space<vmem>>, vector<1x1x8x8xbf16>
    %24 = vector.shape_cast %23 : vector<1x1x8x8xbf16> to vector<8x8xbf16>
    %25 = vector.shape_cast %22 : vector<8x8xbf16> to vector<1x1x8x8xbf16>
    tpu.vector_store %arg10[%c0_16, %c2, %c0_17, %c0_18], %25 {strides = array<i32>} : memref<1x4x8x8xbf16, #tpu.memory_space<vmem>>, vector<1x1x8x8xbf16>,
    %26 = vector.extract_strided_slice %6 {offsets = [0, 384], sizes = [8, 128], strides = [1, 1]} : vector<8x512xbf16> to vector<8x128xbf16>
    %cst_19 = arith.constant dense<0.000000e+00> : vector<8x8xf32>
    %27 = tpu.matmul %26, %7, %cst_19 {dimension_numbers = #tpu.dot_dimension_numbers<[1], [1], [0], [0], [0, 0, 1, 0], [], []>} : vector<8x128xbf16>, vector<8x128xbf16>, vector<8x8xf32> -> vector<8x8xf32>
    %28 = arith.truncf %27 : vector<8x8xf32> to vector<8x8xbf16>
    %c0_20 = arith.constant 0 : index
    %c3 = arith.constant 3 : index
    %c0_21 = arith.constant 0 : index
    %c0_22 = arith.constant 0 : index
    %29 = vector.load %arg10[%c0_20, %c3, %c0_21, %c0_22] : memref<1x4x8x8xbf16, #tpu.memory_space<vmem>>, vector<1x1x8x8xbf16>
    %30 = vector.shape_cast %29 : vector<1x1x8x8xbf16> to vector<8x8xbf16>
    %31 = vector.shape_cast %28 : vector<8x8xbf16> to vector<1x1x8x8xbf16>
    tpu.vector_store %arg10[%c0_20, %c3, %c0_21, %c0_22], %31 {strides = array<i32>} : memref<1x4x8x8xbf16, #tpu.memory_space<vmem>>, vector<1x1x8x8xbf16>,
    return
  }
  func.func @transform_0(%arg0: i32, %arg1: i32) -> (i32, i32, i32) {
    %c0_i32 = arith.constant 0 : i32
    %c0_i32_0 = arith.constant 0 : i32
    %c0_i32_1 = arith.constant 0 : i32
    return %arg0, %c0_i32, %c0_i32_0 : i32, i32, i32
  }
  func.func @transform_1(%arg0: i32, %arg1: i32) -> (i32, i32, i32) {
    %c0_i32 = arith.constant 0 : i32
    %c0_i32_0 = arith.constant 0 : i32
    %c0_i32_1 = arith.constant 0 : i32
    return %arg0, %c0_i32, %c0_i32_0 : i32, i32, i32
  }
  func.func @transform_2(%arg0: i32, %arg1: i32) -> (i32, i32) {
    %c0_i32 = arith.constant 0 : i32
    %c0_i32_0 = arith.constant 0 : i32
    %c0_i32_1 = arith.constant 0 : i32
    return %c0_i32, %c0_i32_0 : i32, i32
  }
  func.func @transform_3(%arg0: i32, %arg1: i32) -> (i32, i32) {
    %c0_i32 = arith.constant 0 : i32
    %c0_i32_0 = arith.constant 0 : i32
    %c0_i32_1 = arith.constant 0 : i32
    return %c0_i32, %c0_i32_0 : i32, i32
  }
  func.func @transform_4(%arg0: i32, %arg1: i32) -> (i32, i32) {
    %c0_i32 = arith.constant 0 : i32
    %c0_i32_0 = arith.constant 0 : i32
    %c0_i32_1 = arith.constant 0 : i32
    return %c0_i32, %c0_i32_0 : i32, i32
  }
  func.func @transform_5(%arg0: i32, %arg1: i32) -> (i32, i32) {
    %c0_i32 = arith.constant 0 : i32
    %c0_i32_0 = arith.constant 0 : i32
    %c0_i32_1 = arith.constant 0 : i32
    return %c0_i32, %c0_i32_0 : i32, i32
  }
  func.func @transform_6(%arg0: i32, %arg1: i32) -> (i32, i32) {
    %c0_i32 = arith.constant 0 : i32
    %c0_i32_0 = arith.constant 0 : i32
    return %c0_i32, %arg1 : i32, i32
  }
  func.func @transform_7(%arg0: i32, %arg1: i32) -> (i32, i32, i32) {
    %c0_i32 = arith.constant 0 : i32
    %c0_i32_0 = arith.constant 0 : i32
    %c0_i32_1 = arith.constant 0 : i32
    return %arg0, %c0_i32, %c0_i32_0 : i32, i32, i32
  }
  func.func @transform_8(%arg0: i32, %arg1: i32) -> (i32, i32, i32, i32) {
    %c0_i32 = arith.constant 0 : i32
    %c0_i32_0 = arith.constant 0 : i32
    %c0_i32_1 = arith.constant 0 : i32
    return %arg0, %arg1, %c0_i32, %c0_i32_0 : i32, i32, i32, i32
  }
}

</mosaic_0001>

<llo_original>
// kernel: tpu_custom_call.1
$region0: #{tpu_custom_call.1}
  #allocation0 [shape = 'u32[]', space=smem, size = 0x4, offset = 0x4, fixed_abs, tag = 'smem constant byte address 0x4 - core index']
  #allocation1 [shape = 'u32[144,128]{1,0:T(1,128)}', space=vmem, size = 0x12000, scoped, tag = 'internal scratch']
  #allocation2 [shape = 'bf16[8,128]{1,0:T(8,128)(2,1)}', space=vmem, size = 0x800, scoped, tag = 'scratch operand']
  #allocation3 [shape = 'bf16[8,128]{1,0:T(8,128)(2,1)}', space=vmem, size = 0x800, scoped, tag = 'scratch operand']
  %s0 = inlined_call_operand.hbm [shape: bf16[2,8,64], index: 0, kind: input, shape index: {}]
  %s1 = inlined_call_operand.hbm [shape: f32[2,1,8], index: 1, kind: input, shape index: {}]
  %s2 = inlined_call_operand.hbm [shape: bf16[64,512], index: 2, kind: input, shape index: {}]
  %s3 = inlined_call_operand.vmem [shape: f32[1,512], index: 3, kind: input, shape index: {}]
  %s4 = inlined_call_operand.hbm [shape: bf16[128,128], index: 4, kind: input, shape index: {}]
  %s5 = inlined_call_operand.vmem [shape: f32[1,128], index: 5, kind: input, shape index: {}]
  %s6 = inlined_call_operand.hbm [shape: bf16[128,1024], index: 6, kind: input, shape index: {}]
  %s7 = inlined_call_operand.hbm [shape: f32[2,8,8], index: 7, kind: output, shape index: {0}]
  %s8 = inlined_call_operand.hbm [shape: bf16[2,8,8,8], index: 8, kind: output, shape index: {1}]
  %9 = xla_tuple %s7, %s8
  %s10 = sld [smem:[#allocation0]]
  $region93: #{tpu_custom_call.1} parent=0
    _
  %s12 = ssub.s32 1, %s10
  %s13 = scalar_select 0, %s12, %s10
  $region1: #{tpu_custom_call.1} parent=0
    #allocation4 [shape = 'u8[4096]{0}', space=vmem, size = 0x1000, scoped, tag = 'input window, operand 0']
    #allocation5 [shape = 's32[2]{0}', space=sflag, size = 0x8, scoped, tag = 'scoped memory for tpu_custom_call.1']
    #allocation6 [shape = 's32[2]{0}', space=sflag, size = 0x8, scoped, tag = 'scoped memory for tpu_custom_call.1']
    #allocation7 [shape = 'u8[1024]{0}', space=vmem, size = 0x400, scoped, tag = 'input window, operand 1']
    #allocation8 [shape = 's32[2]{0}', space=sflag, size = 0x8, scoped, tag = 'scoped memory for tpu_custom_call.1']
    #allocation9 [shape = 'u8[65536]{0}', space=vmem, size = 0x10000, scoped, tag = 'input window, operand 2, single buffered']
    #allocation10 [shape = 'u8[32768]{0}', space=vmem, size = 0x8000, scoped, tag = 'input window, operand 4, single buffered']
    #allocation11 [shape = 's32[1]{0}', space=sflag, size = 0x4, scoped, tag = 'scoped memory for tpu_custom_call.1']
    #allocation12 [shape = 'u8[262144]{0}', space=vmem, size = 0x40000, scoped, tag = 'input window, operand 6']
    #allocation13 [shape = 'u8[8192]{0}', space=vmem, size = 0x2000, scoped, tag = 'output window, operand 0']
    #allocation14 [shape = 'u8[16384]{0}', space=vmem, size = 0x4000, scoped, tag = 'output window, operand 1']
    #allocation15 [shape = 's32[2]{0}', space=sflag, size = 0x8, scoped, tag = 'scoped memory for tpu_custom_call.1']
    %14 = vsyncpa [#allocation5], 0
    %s15 = scalar_lea.sflag [#allocation5], 1
    %16 = vsyncpa %s15, 0
    %17 = vsyncpa [#allocation8], 0
    %s18 = scalar_lea.sflag [#allocation8], 1
    %19 = vsyncpa %s18, 0
    %20 = vsyncpa [#allocation11], 0
    %21 = vsyncpa [#allocation6], 0
    %s22 = scalar_lea.sflag [#allocation6], 1
    %23 = vsyncpa %s22, 0
    %24 = vsyncpa [#allocation15], 0
    %s25 = scalar_lea.sflag [#allocation15], 1
    %26 = vsyncpa %s25, 0
    loop: start=0, step=1, limit=6
    $region2: #{tpu_custom_call.1} parent=1 // loop_pre_header
      _
    $region3: #{tpu_custom_call.1} parent=1 // loop_header
      %s28 = sphi 0, %s32
      %p29 = scmp.ge.s32.totalorder %s28, 6
      %s35 = sphi 0, %s47
      %s36 = sphi 0, %s43
      %s37 = sphi 0, %s35
      %s38 = sphi 0, %s36
      %s39 = sphi 0, %s37
      %s40 = sphi 0, %s38
      %s50 = sphi 0, %s52
      %s53 = sphi 0, %s50
      %s54 = sphi 0, %s53
      %s70 = sphi 0, %s54
      %s76 = sphi 0, %s78
      %s79 = sphi 0, %s76
      %s80 = sphi 0, %s79
      %s96 = sphi 0, %s80
      %s100 = sphi 0, %s100
      %s102 = sphi 0, %s100
      %s103 = sphi 0, %s102
      %s117 = sphi 0, %s103
      %s121 = sphi 0, %s121
      %s123 = sphi 0, %s121
      %s124 = sphi 0, %s123
      %s138 = sphi 0, %s124
      %s142 = sphi 0, %s142
      %s144 = sphi 0, %s142
      %s145 = sphi 0, %s144
      %s159 = sphi 0, %s145
      %s163 = sphi 0, %s163
      %s165 = sphi 0, %s163
      %s166 = sphi 0, %s165
      %s180 = sphi 0, %s166
      %s186 = sphi 0, %s188
      %s189 = sphi 0, %s186
      %s190 = sphi 0, %s189
      %s206 = sphi 0, %s190
      %s212 = sphi 0, %s214
      %s215 = sphi 0, %s212
      %s216 = sphi 0, %s215
      %s232 = sphi 0, %s216
      %s240 = sphi 0, %s242
      %s243 = sphi 0, %s240
      %s244 = sphi 0, %s243
      %s260 = sphi 0, %s244
    $region4: #{tpu_custom_call.1} parent=1 // loop_header_branch
      %31 = sbr.rel (%p29) target = $region8
    $region5: #{tpu_custom_call.1} parent=1 // loop_body
      %s33 = ssub.s32 %s28, 1
      %s34 = ssub.s32 %s28, 2
      %s41 = sadd.s32 1, %s36
      %p42 = scmp.ge.s32.totalorder %s41, 2
      %s43 = scalar_select %p42, 0, %s41
      %s44 = sadd.s32 1, %s35
      %s45 = scalar_select %p42, %s44, %s35
      %p46 = scmp.ge.s32.totalorder %s45, 2
      %s47 = scalar_select %p46, 0, %s45
      %s48 = ssub.s32 %s35, %s47
      %p49 = scmp.eq.s32.totalorder %s48, 0
      %s51 = sadd.s32 %s50, 1
      %s52 = scalar_select %p49, %s50, %s51
      %p55 = pneg %p49
      %p56 = scmp.eq.s32.totalorder %s28, 3
      %p57 = por %p55, %p56
      %p58 = scmp.ne.s32.totalorder %s50, %s53
      %p59 = scmp.eq.s32.totalorder %s28, 0
      %p60 = por %p58, %p59
      %p61 = scmp.ne.s32.totalorder %s50, %s53
      %p62 = scmp.eq.s32.totalorder %s33, 3
      %p63 = por %p61, %p62
      %p64 = scmp.ne.s32.totalorder %s53, %s54
      %p65 = scmp.eq.s32.totalorder %s33, 0
      %p66 = por %p64, %p65
      %p67 = scmp.ne.s32.totalorder %s53, %s54
      %p68 = scmp.eq.s32.totalorder %s34, 3
      %p69 = por %p67, %p68
      %p71 = scmp.ne.s32.totalorder %s54, %s70
      %p72 = scmp.eq.s32.totalorder %s34, 0
      %p73 = por %p71, %p72
      %s74 = ssub.s32 %s35, %s47
      %p75 = scmp.eq.s32.totalorder %s74, 0
      %s77 = sadd.s32 %s76, 1
      %s78 = scalar_select %p75, %s76, %s77
      %p81 = pneg %p75
      %p82 = scmp.eq.s32.totalorder %s28, 3
      %p83 = por %p81, %p82
      %p84 = scmp.ne.s32.totalorder %s76, %s79
      %p85 = scmp.eq.s32.totalorder %s28, 0
      %p86 = por %p84, %p85
      %p87 = scmp.ne.s32.totalorder %s76, %s79
      %p88 = scmp.eq.s32.totalorder %s33, 3
      %p89 = por %p87, %p88
      %p90 = scmp.ne.s32.totalorder %s79, %s80
      %p91 = scmp.eq.s32.totalorder %s33, 0
      %p92 = por %p90, %p91
      %p93 = scmp.ne.s32.totalorder %s79, %s80
      %p94 = scmp.eq.s32.totalorder %s34, 3
      %p95 = por %p93, %p94
      %p97 = scmp.ne.s32.totalorder %s80, %s96
      %p98 = scmp.eq.s32.totalorder %s34, 0
      %p99 = por %p97, %p98
      %s101 = sadd.s32 %s100, 1
      %p104 = scmp.eq.s32.totalorder %s28, 3
      %p105 = scmp.ne.s32.totalorder %s100, %s102
      %p106 = scmp.eq.s32.totalorder %s28, 0
      %p107 = por %p105, %p106
      %p108 = scmp.ne.s32.totalorder %s100, %s102
      %p109 = scmp.eq.s32.totalorder %s33, 3
      %p110 = por %p108, %p109
      %p111 = scmp.ne.s32.totalorder %s102, %s103
      %p112 = scmp.eq.s32.totalorder %s33, 0
      %p113 = por %p111, %p112
      %p114 = scmp.ne.s32.totalorder %s102, %s103
      %p115 = scmp.eq.s32.totalorder %s34, 3
      %p116 = por %p114, %p115
      %p118 = scmp.ne.s32.totalorder %s103, %s117
      %p119 = scmp.eq.s32.totalorder %s34, 0
      %p120 = por %p118, %p119
      %s122 = sadd.s32 %s121, 1
      %p125 = scmp.eq.s32.totalorder %s28, 3
      %p126 = scmp.ne.s32.totalorder %s121, %s123
      %p127 = scmp.eq.s32.totalorder %s28, 0
      %p128 = por %p126, %p127
      %p129 = scmp.ne.s32.totalorder %s121, %s123
      %p130 = scmp.eq.s32.totalorder %s33, 3
      %p131 = por %p129, %p130
      %p132 = scmp.ne.s32.totalorder %s123, %s124
      %p133 = scmp.eq.s32.totalorder %s33, 0
      %p134 = por %p132, %p133
      %p135 = scmp.ne.s32.totalorder %s123, %s124
      %p136 = scmp.eq.s32.totalorder %s34, 3
      %p137 = por %p135, %p136
      %p139 = scmp.ne.s32.totalorder %s124, %s138
      %p140 = scmp.eq.s32.totalorder %s34, 0
      %p141 = por %p139, %p140
      %s143 = sadd.s32 %s142, 1
      %p146 = scmp.eq.s32.totalorder %s28, 3
      %p147 = scmp.ne.s32.totalorder %s142, %s144
      %p148 = scmp.eq.s32.totalorder %s28, 0
      %p149 = por %p147, %p148
      %p150 = scmp.ne.s32.totalorder %s142, %s144
      %p151 = scmp.eq.s32.totalorder %s33, 3
      %p152 = por %p150, %p151
      %p153 = scmp.ne.s32.totalorder %s144, %s145
      %p154 = scmp.eq.s32.totalorder %s33, 0
      %p155 = por %p153, %p154
      %p156 = scmp.ne.s32.totalorder %s144, %s145
      %p157 = scmp.eq.s32.totalorder %s34, 3
      %p158 = por %p156, %p157
      %p160 = scmp.ne.s32.totalorder %s145, %s159
      %p161 = scmp.eq.s32.totalorder %s34, 0
      %p162 = por %p160, %p161
      %s164 = sadd.s32 %s163, 1
      %p167 = scmp.eq.s32.totalorder %s28, 3
      %p168 = scmp.ne.s32.totalorder %s163, %s165
      %p169 = scmp.eq.s32.totalorder %s28, 0
      %p170 = por %p168, %p169
      %p171 = scmp.ne.s32.totalorder %s163, %s165
      %p172 = scmp.eq.s32.totalorder %s33, 3
      %p173 = por %p171, %p172
      %p174 = scmp.ne.s32.totalorder %s165, %s166
      %p175 = scmp.eq.s32.totalorder %s33, 0
      %p176 = por %p174, %p175
      %p177 = scmp.ne.s32.totalorder %s165, %s166
      %p178 = scmp.eq.s32.totalorder %s34, 3
      %p179 = por %p177, %p178
      %p181 = scmp.ne.s32.totalorder %s166, %s180
      %p182 = scmp.eq.s32.totalorder %s34, 0
      %p183 = por %p181, %p182
      %s184 = ssub.s32 %s36, %s43
      %p185 = scmp.eq.s32.totalorder %s184, 0
      %s187 = sadd.s32 %s186, 1
      %s188 = scalar_select %p185, %s186, %s187
      %p191 = pneg %p185
      %p192 = scmp.eq.s32.totalorder %s28, 3
      %p193 = por %p191, %p192
      %p194 = scmp.ne.s32.totalorder %s186, %s189
      %p195 = scmp.eq.s32.totalorder %s28, 0
      %p196 = por %p194, %p195
      %p197 = scmp.ne.s32.totalorder %s186, %s189
      %p198 = scmp.eq.s32.totalorder %s33, 3
      %p199 = por %p197, %p198
      %p200 = scmp.ne.s32.totalorder %s189, %s190
      %p201 = scmp.eq.s32.totalorder %s33, 0
      %p202 = por %p200, %p201
      %p203 = scmp.ne.s32.totalorder %s189, %s190
      %p204 = scmp.eq.s32.totalorder %s34, 3
      %p205 = por %p203, %p204
      %p207 = scmp.ne.s32.totalorder %s190, %s206
      %p208 = scmp.eq.s32.totalorder %s34, 0
      %p209 = por %p207, %p208
      %s210 = ssub.s32 %s35, %s47
      %p211 = scmp.eq.s32.totalorder %s210, 0
      %s213 = sadd.s32 %s212, 1
      %s214 = scalar_select %p211, %s212, %s213
      %p217 = pneg %p211
      %p218 = scmp.eq.s32.totalorder %s28, 3
      %p219 = por %p217, %p218
      %p220 = scmp.ne.s32.totalorder %s212, %s215
      %p221 = scmp.eq.s32.totalorder %s28, 0
      %p222 = por %p220, %p221
      %p223 = scmp.ne.s32.totalorder %s212, %s215
      %p224 = scmp.eq.s32.totalorder %s33, 3
      %p225 = por %p223, %p224
      %p226 = scmp.ne.s32.totalorder %s215, %s216
      %p227 = scmp.eq.s32.totalorder %s33, 0
      %p228 = por %p226, %p227
      %p229 = scmp.ne.s32.totalorder %s215, %s216
      %p230 = scmp.eq.s32.totalorder %s34, 3
      %p231 = por %p229, %p230
      %p233 = scmp.ne.s32.totalorder %s216, %s232
      %p234 = scmp.eq.s32.totalorder %s34, 0
      %p235 = por %p233, %p234
      %s236 = ssub.s32 %s35, %s47
      %s237 = ssub.s32 %s36, %s43
      %s238 = sor.u32 %s236, %s237
      %p239 = scmp.eq.s32.totalorder %s238, 0
      %s241 = sadd.s32 %s240, 1
      %s242 = scalar_select %p239, %s240, %s241
      %p245 = pneg %p239
      %p246 = scmp.eq.s32.totalorder %s28, 3
      %p247 = por %p245, %p246
      %p248 = scmp.ne.s32.totalorder %s240, %s243
      %p249 = scmp.eq.s32.totalorder %s28, 0
      %p250 = por %p248, %p249
      %p251 = scmp.ne.s32.totalorder %s240, %s243
      %p252 = scmp.eq.s32.totalorder %s33, 3
      %p253 = por %p251, %p252
      %p254 = scmp.ne.s32.totalorder %s243, %s244
      %p255 = scmp.eq.s32.totalorder %s33, 0
      %p256 = por %p254, %p255
      %p257 = scmp.ne.s32.totalorder %s243, %s244
      %p258 = scmp.eq.s32.totalorder %s34, 3
      %p259 = por %p257, %p258
      %p261 = scmp.ne.s32.totalorder %s244, %s260
      %p262 = scmp.eq.s32.totalorder %s34, 0
      %p263 = por %p261, %p262
      %p264 = scmp.le.s32.totalorder 1, %s28
      %p265 = scmp.lt.s32.totalorder %s28, 5
      %p266 = pnand %p264, %p265
      %p267 = pneg %p266
      // Predicated region
      $region9: #{tpu_custom_call.1} parent=5 // pred_check
        _
      $region10: #{tpu_custom_call.1} parent=5 // pred_check_branch
        %269 = sbr.rel (%p266) target = $region12
      $region11: #{tpu_custom_call.1} parent=5 // pred_region
        %s270 = ssub.s32 %s28, 1
        // Predicated region
        $region13: #{tpu_custom_call.1} parent=11 // pred_check
          %p271 = pneg %p113
        $region14: #{tpu_custom_call.1} parent=11 // pred_check_branch
          %273 = sbr.rel (%p271) target = $region16
        $region15: #{tpu_custom_call.1} parent=11 // pred_region
          %s275 = ssub.s32 2048, 2048
          %276 = vsyncadd [#allocation8], %s275
          %s277 = sshll.u32 [#allocation9], 4
          %s278 = int_to_ptr.vmem [resolvable:$true] %s277
          %283 = dma.hbm_to_vmem [thread:$0]  %s2, 2048, %s278, [#allocation8], 256, 256, 16
        $region16: #{tpu_custom_call.1} parent=11 // pred_fallthru
          _
        // Predicated region
        $region17: #{tpu_custom_call.1} parent=11 // pred_check
          %p284 = pneg %p134
        $region18: #{tpu_custom_call.1} parent=11 // pred_check_branch
          %286 = sbr.rel (%p284) target = $region20
        $region19: #{tpu_custom_call.1} parent=11 // pred_region
          _
        $region20: #{tpu_custom_call.1} parent=11 // pred_fallthru
          _
        // Predicated region
        $region21: #{tpu_custom_call.1} parent=11 // pred_check
          %p287 = pneg %p155
        $region22: #{tpu_custom_call.1} parent=11 // pred_check_branch
          %289 = sbr.rel (%p287) target = $region24
        $region23: #{tpu_custom_call.1} parent=11 // pred_region
          %s291 = ssub.s32 1024, 1024
          %292 = vsyncadd [#allocation11], %s291
          %s293 = sshll.u32 [#allocation10], 4
          %s294 = int_to_ptr.vmem [resolvable:$true] %s293
          %299 = dma.hbm_to_vmem [thread:$0]  %s4, 1024, %s294, [#allocation11], 64, 64, 4
        $region24: #{tpu_custom_call.1} parent=11 // pred_fallthru
          _
        // Predicated region
        $region25: #{tpu_custom_call.1} parent=11 // pred_check
          %p300 = pneg %p176
        $region26: #{tpu_custom_call.1} parent=11 // pred_check_branch
          %302 = sbr.rel (%p300) target = $region28
        $region27: #{tpu_custom_call.1} parent=11 // pred_region
          _
        $region28: #{tpu_custom_call.1} parent=11 // pred_fallthru
          _
      $region12: #{tpu_custom_call.1} parent=5 // pred_fallthru
        _
      %p303 = scmp.lt.s32.totalorder %s28, 4
      // Predicated region
      $region29: #{tpu_custom_call.1} parent=5 // pred_check
        %p304 = pneg %p303
      $region30: #{tpu_custom_call.1} parent=5 // pred_check_branch
        %306 = sbr.rel (%p304) target = $region32
      $region31: #{tpu_custom_call.1} parent=5 // pred_region
        // Predicated region
        $region33: #{tpu_custom_call.1} parent=31 // pred_check
          %p307 = pneg %p60
        $region34: #{tpu_custom_call.1} parent=31 // pred_check_branch
          %309 = sbr.rel (%p307) target = $region36
        $region35: #{tpu_custom_call.1} parent=31 // pred_region
          %s310 = sand.u32 %s28, 1
          %s311 = scalar_lea.sflag [#allocation5], %s310
          %s312 = sand.u32 %s50, 1
          %s313 = smul.addr %s312, 4
          %s314 = scalar_lea.vmem [#allocation4], %s313
          %s316 = ssub.s32 64, 64
          %317 = vsyncadd %s311, %s316
          %s318 = smul.addr %s35, 64
          %s319 = scalar_lea.hbm %s0, %s318
          %s321 = sshll.u32 %s314, 4
          %s322 = int_to_ptr.vmem [resolvable:$true] %s321
          %324 = dma.hbm_to_vmem [thread:$0]  %s319, 64, %s322, %s311
        $region36: #{tpu_custom_call.1} parent=31 // pred_fallthru
          _
        // Predicated region
        $region37: #{tpu_custom_call.1} parent=31 // pred_check
          %p325 = pneg %p86
        $region38: #{tpu_custom_call.1} parent=31 // pred_check_branch
          %327 = sbr.rel (%p325) target = $region40
        $region39: #{tpu_custom_call.1} parent=31 // pred_region
          %s328 = sand.u32 %s28, 1
          %s329 = scalar_lea.sflag [#allocation8], %s328
          %s330 = sand.u32 %s76, 1
          %s331 = scalar_lea.vmem [#allocation7], %s330
          %s333 = ssub.s32 16, 16
          %334 = vsyncadd %s329, %s333
          %s335 = smul.addr %s35, 16
          %s336 = scalar_lea.hbm %s1, %s335
          %s338 = sshll.u32 %s331, 4
          %s339 = int_to_ptr.vmem [resolvable:$true] %s338
          %341 = dma.hbm_to_vmem [thread:$0]  %s336, 16, %s339, %s329
        $region40: #{tpu_custom_call.1} parent=31 // pred_fallthru
          _
        // Predicated region
        $region41: #{tpu_custom_call.1} parent=31 // pred_check
          %p342 = pneg %p196
        $region42: #{tpu_custom_call.1} parent=31 // pred_check_branch
          %344 = sbr.rel (%p342) target = $region44
        $region43: #{tpu_custom_call.1} parent=31 // pred_region
          %s345 = sand.u32 %s28, 1
          %s346 = scalar_lea.sflag [#allocation5], %s345
          %s347 = sand.u32 %s186, 1
          %s348 = smul.addr %s347, 256
          %s349 = scalar_lea.vmem [#allocation12], %s348
          %s350 = smul.u32 4, %s36
          %s352 = ssub.s32 4096, 4096
          %353 = vsyncadd %s346, %s352
          %s354 = smul.addr %s350, 64
          %s355 = scalar_lea.hbm %s6, %s354
          %s356 = sshll.u32 %s349, 4
          %s357 = int_to_ptr.vmem [resolvable:$true] %s356
          %362 = dma.hbm_to_vmem [thread:$0]  %s355, 4096, %s357, %s346, 512, 256, 16
        $region44: #{tpu_custom_call.1} parent=31 // pred_fallthru
          _
      $region32: #{tpu_custom_call.1} parent=5 // pred_fallthru
        _
      %p363 = scmp.le.s32.totalorder 1, %s28
      %p364 = scmp.lt.s32.totalorder %s28, 5
      %p365 = pnand %p363, %p364
      %p366 = pneg %p365
      // Predicated region
      $region45: #{tpu_custom_call.1} parent=5 // pred_check
        _
      $region46: #{tpu_custom_call.1} parent=5 // pred_check_branch
        %368 = sbr.rel (%p365) target = $region48
      $region47: #{tpu_custom_call.1} parent=5 // pred_region
        %s369 = ssub.s32 %s28, 1
        %s370 = sand.u32 %s33, 1
        %s371 = scalar_lea.sflag [#allocation5], %s370
        %s372 = sand.u32 %s53, 1
        %s373 = smul.addr %s372, 4
        %s374 = scalar_lea.vmem [#allocation4], %s373
        // Predicated region
        $region49: #{tpu_custom_call.1} parent=47 // pred_check
          %p375 = pneg %p66
        $region50: #{tpu_custom_call.1} parent=47 // pred_check_branch
          %377 = sbr.rel (%p375) target = $region52
        $region51: #{tpu_custom_call.1} parent=47 // pred_region
          %378 = dma.done %s371, 64
        $region52: #{tpu_custom_call.1} parent=47 // pred_fallthru
          _
        %s379 = sand.u32 %s33, 1
        %s380 = scalar_lea.sflag [#allocation8], %s379
        %s381 = sand.u32 %s79, 1
        %s382 = scalar_lea.vmem [#allocation7], %s381
        // Predicated region
        $region53: #{tpu_custom_call.1} parent=47 // pred_check
          %p383 = pneg %p92
        $region54: #{tpu_custom_call.1} parent=47 // pred_check_branch
          %385 = sbr.rel (%p383) target = $region56
        $region55: #{tpu_custom_call.1} parent=47 // pred_region
          %386 = dma.done %s380, 16
        $region56: #{tpu_custom_call.1} parent=47 // pred_fallthru
          _
        // Predicated region
        $region57: #{tpu_custom_call.1} parent=47 // pred_check
          %p387 = pneg %p113
        $region58: #{tpu_custom_call.1} parent=47 // pred_check_branch
          %389 = sbr.rel (%p387) target = $region60
        $region59: #{tpu_custom_call.1} parent=47 // pred_region
          %390 = dma.done [#allocation8], 2048
        $region60: #{tpu_custom_call.1} parent=47 // pred_fallthru
          _
        // Predicated region
        $region61: #{tpu_custom_call.1} parent=47 // pred_check
          %p391 = pneg %p155
        $region62: #{tpu_custom_call.1} parent=47 // pred_check_branch
          %393 = sbr.rel (%p391) target = $region64
        $region63: #{tpu_custom_call.1} parent=47 // pred_region
          %394 = dma.done [#allocation11], 1024
        $region64: #{tpu_custom_call.1} parent=47 // pred_fallthru
          _
        %s395 = sand.u32 %s33, 1
        %s396 = scalar_lea.sflag [#allocation5], %s395
        %s397 = sand.u32 %s189, 1
        %s398 = smul.addr %s397, 256
        %s399 = scalar_lea.vmem [#allocation12], %s398
        // Predicated region
        $region65: #{tpu_custom_call.1} parent=47 // pred_check
          %p400 = pneg %p202
        $region66: #{tpu_custom_call.1} parent=47 // pred_check_branch
          %402 = sbr.rel (%p400) target = $region68
        $region67: #{tpu_custom_call.1} parent=47 // pred_region
          %403 = dma.done %s396, 4096
        $region68: #{tpu_custom_call.1} parent=47 // pred_fallthru
          _
        %s404 = sand.u32 %s33, 1
        %s405 = scalar_lea.sflag [#allocation5], %s404
        %s406 = sand.u32 %s53, 1
        %s407 = smul.addr %s406, 4
        %s408 = scalar_lea.vmem [#allocation4], %s407
        %p409 = pneg %p66
        %p410 = pneg %p63
        %s411 = sand.u32 %s33, 1
        %s412 = scalar_lea.sflag [#allocation8], %s411
        %s413 = sand.u32 %s79, 1
        %s414 = scalar_lea.vmem [#allocation7], %s413
        %p415 = pneg %p92
        %p416 = pneg %p89
        %p417 = pneg %p113
        %p418 = pneg %p110
        %p419 = pneg %p134
        %p420 = pneg %p131
        %p421 = pneg %p155
        %p422 = pneg %p152
        %p423 = pneg %p176
        %p424 = pneg %p173
        %s425 = sand.u32 %s33, 1
        %s426 = scalar_lea.sflag [#allocation5], %s425
        %s427 = sand.u32 %s189, 1
        %s428 = smul.addr %s427, 256
        %s429 = scalar_lea.vmem [#allocation12], %s428
        %p430 = pneg %p202
        %p431 = pneg %p199
        %p432 = pneg %p228
        %p433 = pneg %p225
        %s434 = sand.u32 %s215, 1
        %s435 = scalar_lea.sflag [#allocation6], %s434
        %s436 = sand.u32 %s215, 1
        %s437 = smul.addr %s436, 8
        %s438 = scalar_lea.vmem [#allocation13], %s437
        %p439 = pneg %p256
        %p440 = pneg %p253
        %s441 = sand.u32 %s243, 1
        %s442 = scalar_lea.sflag [#allocation15], %s441
        %s443 = sand.u32 %s243, 1
        %s444 = smul.addr %s443, 16
        %s445 = scalar_lea.vmem [#allocation14], %s444
        %s446 = smul.u32 4, %s38
        %s447 = smul.u32 4, %s38
        %p449 = scmp.eq.s32.totalorder %s38, 0
        // Predicated region
        $region69: #{tpu_custom_call.1} parent=47 // pred_check
          %p450 = pneg %p449
        $region70: #{tpu_custom_call.1} parent=47 // pred_check_branch
          %452 = sbr.rel (%p450) target = $region72
        $region71: #{tpu_custom_call.1} parent=47 // pred_region
          %v453 = vld [vmem:[%s374] sm:$0xf]
          %v454 = vld [vmem:[#allocation9] sm:$0xff]
          %v455 = vld [vmem:[#allocation9 + $0x8] sm:$0xff]
          %v456 = vld [vmem:[#allocation9 + $0x10] sm:$0xff]
          %v457 = vld [vmem:[#allocation9 + $0x18] sm:$0xff]
          %v458 = vld [vmem:[#allocation9 + $0x20] sm:$0xff]
          %v459 = vld [vmem:[#allocation9 + $0x28] sm:$0xff]
          %v460 = vld [vmem:[#allocation9 + $0x30] sm:$0xff]
          %v461 = vld [vmem:[#allocation9 + $0x38] sm:$0xff]
          %v462 = vld [vmem:[#allocation9 + $0x40] sm:$0xff]
          %v463 = vld [vmem:[#allocation9 + $0x48] sm:$0xff]
          %v464 = vld [vmem:[#allocation9 + $0x50] sm:$0xff]
          %v465 = vld [vmem:[#allocation9 + $0x58] sm:$0xff]
          %v466 = vld [vmem:[#allocation9 + $0x60] sm:$0xff]
          %v467 = vld [vmem:[#allocation9 + $0x68] sm:$0xff]
          %v468 = vld [vmem:[#allocation9 + $0x70] sm:$0xff]
          %v469 = vld [vmem:[#allocation9 + $0x78] sm:$0xff]
          %v470 = vld [vmem:[%s3] sm:$0xf]
          %v472 = vlaneseq
          %v473 = vshrl.u32 %v472, 7
          %v474 = vsub.s32 0, %v473
          %v475 = vrot.slane %v470, %v474
          %v476 = vlaneseq
          %v477 = vshrl.u32 %v476, 7
          %v478 = vsub.s32 1, %v477
          %v479 = vrot.slane %v470, %v478
          %v480 = vlaneseq
          %v481 = vshrl.u32 %v480, 7
          %v482 = vsub.s32 2, %v481
          %v483 = vrot.slane %v470, %v482
          %v484 = vlaneseq
          %v485 = vshrl.u32 %v484, 7
          %v486 = vsub.s32 3, %v485
          %v487 = vrot.slane %v470, %v486
          %v508 = vunpack.c.l.b16 %v454
          %v509 = vunpack.c.h.b16 %v454
          %v510 = vunpack.c.l.b16 %v455
          %v511 = vunpack.c.h.b16 %v455
          %v512 = vunpack.c.l.b16 %v456
          %v513 = vunpack.c.h.b16 %v456
          %v514 = vunpack.c.l.b16 %v457
          %v515 = vunpack.c.h.b16 %v457
          %v516 = vunpack.c.l.b16 %v458
          %v517 = vunpack.c.h.b16 %v458
          %v518 = vunpack.c.l.b16 %v459
          %v519 = vunpack.c.h.b16 %v459
          %v520 = vunpack.c.l.b16 %v460
          %v521 = vunpack.c.h.b16 %v460
          %v522 = vunpack.c.l.b16 %v461
          %v523 = vunpack.c.h.b16 %v461
          %v524 = vunpack.c.l.b16 %v462
          %v525 = vunpack.c.h.b16 %v462
          %v526 = vunpack.c.l.b16 %v463
          %v527 = vunpack.c.h.b16 %v463
          %v528 = vunpack.c.l.b16 %v464
          %v529 = vunpack.c.h.b16 %v464
          %v530 = vunpack.c.l.b16 %v465
          %v531 = vunpack.c.h.b16 %v465
          %v532 = vunpack.c.l.b16 %v466
          %v533 = vunpack.c.h.b16 %v466
          %v534 = vunpack.c.l.b16 %v467
          %v535 = vunpack.c.h.b16 %v467
          %v536 = vunpack.c.l.b16 %v468
          %v537 = vunpack.c.h.b16 %v468
          %v538 = vunpack.c.l.b16 %v469
          %v539 = vunpack.c.h.b16 %v469
          %v540 = vpack.c.b16 %v512, %v508
          %v541 = vpack.c.b16 %v513, %v509
          %v542 = vpack.c.b16 %v514, %v510
          %v543 = vpack.c.b16 %v515, %v511
          %v544 = vpack.c.b16 %v520, %v516
          %v545 = vpack.c.b16 %v521, %v517
          %v546 = vpack.c.b16 %v522, %v518
          %v547 = vpack.c.b16 %v523, %v519
          %v548 = vpack.c.b16 %v528, %v524
          %v549 = vpack.c.b16 %v529, %v525
          %v550 = vpack.c.b16 %v530, %v526
          %v551 = vpack.c.b16 %v531, %v527
          %v552 = vpack.c.b16 %v536, %v532
          %v553 = vpack.c.b16 %v537, %v533
          %v554 = vpack.c.b16 %v538, %v534
          %v555 = vpack.c.b16 %v539, %v535
          %vm572 = vcmask 523264
          %v574 = vsel %vm572, %v453, 0
          %576 = vmatprep.subr.bf16.mxu0 0
          %577 = vmatpush1.bf16.msra.mxu0 0
          %578 = vmatprep.subr.bf16.mxu0 0
          %579 = vmatpush1.bf16.msra.mxu0 0
          %580 = vmatprep.subr.bf16.mxu0 0
          %581 = vmatpush1.bf16.msra.mxu0 0
          %582 = vmatprep.subr.bf16.mxu0 0
          %583 = vmatpush1.bf16.msra.mxu0 0
          %584 = vmatprep.subr.bf16.mxu0 %v553
          %585 = vmatpush1.bf16.msra.mxu0 %v552
          %586 = vmatprep.subr.bf16.mxu0 %v549
          %587 = vmatpush1.bf16.msra.mxu0 %v548
          %588 = vmatprep.subr.bf16.mxu0 %v545
          %589 = vmatpush1.bf16.msra.mxu0 %v544
          %590 = vmatprep.subr.bf16.mxu0 %v541
          %591 = vmatpush1.bf16.msra.mxu0 %v540
          %592 = vmatprep.subr.bf16.mxu0 0
          %593 = vmatpush2.bf16.msra.mxu0 0
          %594 = vmatprep.subr.bf16.mxu0 0
          %595 = vmatpush2.bf16.msra.mxu0 0
          %596 = vmatprep.subr.bf16.mxu0 0
          %597 = vmatpush2.bf16.msra.mxu0 0
          %598 = vmatprep.subr.bf16.mxu0 0
          %599 = vmatpush2.bf16.msra.mxu0 0
          %600 = vmatprep.subr.bf16.mxu0 0
          %601 = vmatpush2.bf16.msra.mxu0 0
          %602 = vmatprep.subr.bf16.mxu0 0
          %603 = vmatpush2.bf16.msra.mxu0 0
          %604 = vmatprep.subr.bf16.mxu0 0
          %605 = vmatpush2.bf16.msra.mxu0 0
          %606 = vmatprep.subr.bf16.mxu0 0
          %607 = vmatpush2.bf16.msra.mxu0 0
          %608 = vmatprep.mubr.bf16.mxu0 0
          %609 = vmatmul.mubr.bf16.gmra.mxu0 %v574
          %v610 = vpop.f32.mrf.mxu0
          %v611 = vadd.f32 %v475, %v610
          %v612 = vpop.f32.mrf.mxu0
          %v613 = vadd.f32 %v479, %v612
          %v614 = vpop.f32.mrf.mxu0
          %v615 = vpop.f32.mrf.mxu0
          %616 = vdwg.mxu0
          %617 = vmatprep.subr.bf16.mxu0 0
          %618 = vmatpush1.bf16.msra.mxu0 0
          %619 = vmatprep.subr.bf16.mxu0 0
          %620 = vmatpush1.bf16.msra.mxu0 0
          %621 = vmatprep.subr.bf16.mxu0 0
          %622 = vmatpush1.bf16.msra.mxu0 0
          %623 = vmatprep.subr.bf16.mxu0 0
          %624 = vmatpush1.bf16.msra.mxu0 0
          %625 = vmatprep.subr.bf16.mxu0 %v555
          %626 = vmatpush1.bf16.msra.mxu0 %v554
          %627 = vmatprep.subr.bf16.mxu0 %v551
          %628 = vmatpush1.bf16.msra.mxu0 %v550
          %629 = vmatprep.subr.bf16.mxu0 %v547
          %630 = vmatpush1.bf16.msra.mxu0 %v546
          %631 = vmatprep.subr.bf16.mxu0 %v543
          %632 = vmatpush1.bf16.msra.mxu0 %v542
          %633 = vmatprep.subr.bf16.mxu0 0
          %634 = vmatpush2.bf16.msra.mxu0 0
          %635 = vmatprep.subr.bf16.mxu0 0
          %636 = vmatpush2.bf16.msra.mxu0 0
          %637 = vmatprep.subr.bf16.mxu0 0
          %638 = vmatpush2.bf16.msra.mxu0 0
          %639 = vmatprep.subr.bf16.mxu0 0
          %640 = vmatpush2.bf16.msra.mxu0 0
          %641 = vmatprep.subr.bf16.mxu0 0
          %642 = vmatpush2.bf16.msra.mxu0 0
          %643 = vmatprep.subr.bf16.mxu0 0
          %644 = vmatpush2.bf16.msra.mxu0 0
          %645 = vmatprep.subr.bf16.mxu0 0
          %646 = vmatpush2.bf16.msra.mxu0 0
          %647 = vmatprep.subr.bf16.mxu0 0
          %648 = vmatpush2.bf16.msra.mxu0 0
          %649 = vmatprep.mubr.bf16.mxu0 0
          %650 = vmatmul.mubr.bf16.gmra.mxu0 %v574
          %v651 = vpop.f32.mrf.mxu0
          %v652 = vadd.f32 %v483, %v651
          %v653 = vpop.f32.mrf.mxu0
          %v654 = vadd.f32 %v487, %v653
          %v655 = vpop.f32.mrf.mxu0
          %v656 = vpop.f32.mrf.mxu0
          %657 = vdwg.mxu0
          %vm658 = vcmp.gt.f32.partialorder %v611, 0.0
          %vm659 = vcmp.gt.f32.partialorder %v613, 0.0
          %vm660 = vcmp.gt.f32.partialorder %v652, 0.0
          %vm661 = vcmp.gt.f32.partialorder %v654, 0.0
          %v662 = vmul.f32 %v611, 0.1
          %v663 = vmul.f32 %v613, 0.1
          %v664 = vmul.f32 %v652, 0.1
          %v665 = vmul.f32 %v654, 0.1
          %v666 = vsel %vm658, %v611, %v662
          %v667 = vsel %vm659, %v613, %v663
          %v668 = vsel %vm660, %v652, %v664
          %v669 = vsel %vm661, %v654, %v665
          %v670 = vpack.c.bf16 %v666, %v666
          %v671 = vpack.c.bf16 %v667, %v667
          %v672 = vpack.c.bf16 %v668, %v668
          %673 = vst [vmem:[#allocation2] sm:$0xf] %v672
          %v674 = vpack.c.bf16 %v669, %v669
          %675 = vst [vmem:[#allocation3] sm:$0xf] %v674
          %v676 = vld [vmem:[#allocation10] sm:$0xf]
          %v677 = vld [vmem:[#allocation10 + $0x4] sm:$0xf]
          %v678 = vld [vmem:[#allocation10 + $0x8] sm:$0xf]
          %v679 = vld [vmem:[#allocation10 + $0xc] sm:$0xf]
          %v680 = vld [vmem:[#allocation10 + $0x10] sm:$0xf]
          %v681 = vld [vmem:[#allocation10 + $0x14] sm:$0xf]
          %v682 = vld [vmem:[#allocation10 + $0x18] sm:$0xf]
          %v683 = vld [vmem:[#allocation10 + $0x1c] sm:$0xf]
          %v684 = vld [vmem:[#allocation10 + $0x20] sm:$0xf]
          %v685 = vld [vmem:[#allocation10 + $0x24] sm:$0xf]
          %v686 = vld [vmem:[#allocation10 + $0x28] sm:$0xf]
          %v687 = vld [vmem:[#allocation10 + $0x2c] sm:$0xf]
          %v688 = vld [vmem:[#allocation10 + $0x30] sm:$0xf]
          %v689 = vld [vmem:[#allocation10 + $0x34] sm:$0xf]
          %v690 = vld [vmem:[#allocation10 + $0x38] sm:$0xf]
          %v691 = vld [vmem:[#allocation10 + $0x3c] sm:$0xf]
          %v692 = vld [vmem:[%s5] sm:$0x1]
          %v694 = vlaneseq
          %v695 = vshrl.u32 %v694, 7
          %v696 = vsub.s32 0, %v695
          %v697 = vrot.slane %v692, %v696
          %v715 = vunpack.c.l.b16 %v676
          %v716 = vunpack.c.l.b16 %v677
          %v717 = vunpack.c.l.b16 %v678
          %v718 = vunpack.c.l.b16 %v679
          %v719 = vunpack.c.l.b16 %v680
          %v720 = vunpack.c.l.b16 %v681
          %v721 = vunpack.c.l.b16 %v682
          %v722 = vunpack.c.l.b16 %v683
          %v723 = vunpack.c.l.b16 %v684
          %v724 = vunpack.c.l.b16 %v685
          %v725 = vunpack.c.l.b16 %v686
          %v726 = vunpack.c.l.b16 %v687
          %v727 = vunpack.c.l.b16 %v688
          %v728 = vunpack.c.l.b16 %v689
          %v729 = vunpack.c.l.b16 %v690
          %v730 = vunpack.c.l.b16 %v691
          %v731 = vpack.c.b16 %v716, %v715
          %v732 = vpack.c.b16 %v718, %v717
          %v733 = vpack.c.b16 %v720, %v719
          %v734 = vpack.c.b16 %v722, %v721
          %v735 = vpack.c.b16 %v724, %v723
          %v736 = vpack.c.b16 %v726, %v725
          %v737 = vpack.c.b16 %v728, %v727
          %v738 = vpack.c.b16 %v730, %v729
          %747 = vmatprep.subr.bf16.mxu0 0
          %748 = vmatpush1.bf16.msra.mxu0 %v738
          %749 = vmatprep.subr.bf16.mxu0 0
          %750 = vmatpush1.bf16.msra.mxu0 %v737
          %751 = vmatprep.subr.bf16.mxu0 0
          %752 = vmatpush1.bf16.msra.mxu0 %v736
          %753 = vmatprep.subr.bf16.mxu0 0
          %754 = vmatpush1.bf16.msra.mxu0 %v735
          %755 = vmatprep.subr.bf16.mxu0 0
          %756 = vmatpush1.bf16.msra.mxu0 %v734
          %757 = vmatprep.subr.bf16.mxu0 0
          %758 = vmatpush1.bf16.msra.mxu0 %v733
          %759 = vmatprep.subr.bf16.mxu0 0
          %760 = vmatpush1.bf16.msra.mxu0 %v732
          %761 = vmatprep.subr.bf16.mxu0 0
          %762 = vmatpush1.bf16.msra.mxu0 %v731
          %763 = vmatprep.subr.bf16.mxu0 0
          %764 = vmatpush2.bf16.msra.mxu0 0
          %765 = vmatprep.subr.bf16.mxu0 0
          %766 = vmatpush2.bf16.msra.mxu0 0
          %767 = vmatprep.subr.bf16.mxu0 0
          %768 = vmatpush2.bf16.msra.mxu0 0
          %769 = vmatprep.subr.bf16.mxu0 0
          %770 = vmatpush2.bf16.msra.mxu0 0
          %771 = vmatprep.subr.bf16.mxu0 0
          %772 = vmatpush2.bf16.msra.mxu0 0
          %773 = vmatprep.subr.bf16.mxu0 0
          %774 = vmatpush2.bf16.msra.mxu0 0
          %775 = vmatprep.subr.bf16.mxu0 0
          %776 = vmatpush2.bf16.msra.mxu0 0
          %777 = vmatprep.subr.bf16.mxu0 0
          %778 = vmatpush2.bf16.msra.mxu0 0
          %779 = vmatprep.mubr.bf16.mxu0 0
          %780 = vmatmul.mubr.bf16.gmra.mxu0 %v670
          %v781 = vpop.f32.mrf.mxu0
          %v782 = vadd.f32 %v697, %v781
          %v783 = vpop.f32.mrf.mxu0
          %v784 = vpop.f32.mrf.mxu0
          %v785 = vpop.f32.mrf.mxu0
          %786 = vdwg.mxu0
          %v787 = vpack.c.bf16 %v782, %v782
          %788 = vmatprep.subr.bf16.mxu0 0
          %789 = vmatpush1.bf16.xpose.msra.mxu0 0
          %790 = vmatprep.subr.bf16.mxu0 0
          %791 = vmatpush1.bf16.xpose.msra.mxu0 0
          %792 = vmatprep.subr.bf16.mxu0 0
          %793 = vmatpush1.bf16.xpose.msra.mxu0 0
          %794 = vmatprep.subr.bf16.mxu0 0
          %795 = vmatpush1.bf16.xpose.msra.mxu0 0
          %796 = vmatprep.subr.bf16.mxu0 0
          %797 = vmatpush1.bf16.xpose.msra.mxu0 0
          %798 = vmatprep.subr.bf16.mxu0 0
          %799 = vmatpush1.bf16.xpose.msra.mxu0 0
          %800 = vmatprep.subr.bf16.mxu0 0
          %801 = vmatpush1.bf16.xpose.msra.mxu0 0
          %802 = vmatprep.subr.bf16.mxu0 0
          %803 = vmatpush1.bf16.xpose.msra.mxu0 %v671
          %804 = vmatprep.subr.bf16.mxu0 0
          %805 = vmatpush2.bf16.xpose.msra.mxu0 0
          %806 = vmatprep.subr.bf16.mxu0 0
          %807 = vmatpush2.bf16.xpose.msra.mxu0 0
          %808 = vmatprep.subr.bf16.mxu0 0
          %809 = vmatpush2.bf16.xpose.msra.mxu0 0
          %810 = vmatprep.subr.bf16.mxu0 0
          %811 = vmatpush2.bf16.xpose.msra.mxu0 0
          %812 = vmatprep.subr.bf16.mxu0 0
          %813 = vmatpush2.bf16.xpose.msra.mxu0 0
          %814 = vmatprep.subr.bf16.mxu0 0
          %815 = vmatpush2.bf16.xpose.msra.mxu0 0
          %816 = vmatprep.subr.bf16.mxu0 0
          %817 = vmatpush2.bf16.xpose.msra.mxu0 0
          %818 = vmatprep.subr.bf16.mxu0 0
          %819 = vmatpush2.bf16.xpose.msra.mxu0 0
          %820 = vmatprep.mubr.bf16.mxu0 0
          %821 = vmatmul.mubr.bf16.gmra.mxu0 %v787
          %v822 = vpop.f32.mrf.mxu0
          %v823 = vadd.f32 0.0, %v822
          %v824 = vpop.f32.mrf.mxu0
          %v825 = vpop.f32.mrf.mxu0
          %v826 = vpop.f32.mrf.mxu0
          %827 = vdwg.mxu0
          %v828 = vld [vmem:[%s382] sm:$0x1]
          %vm829 = vcmp.gt.f32.partialorder %v828, 0.0
          %v830 = vsel %vm829, 1, 0
          %v831 = vlaneseq
          %v832 = vshrl.u32 %v831, 7
          %v833 = vsub.s32 0, %v832
          %v834 = vrot.slane %v830, %v833
          %vm835 = vcmp.eq.s32.totalorder %v834, 1
          %v836 = vsel %vm835, %v823, -inf
          %vm837 = vcmask 64512
          %838 = vst.msk [vmem:[%s438] sm:$0xff] %vm837, %v836
        $region72: #{tpu_custom_call.1} parent=47 // pred_fallthru
          _
        %v839 = vld [vmem:[#allocation2] sm:$0xf]
        %v840 = vld [vmem:[%s399] sm:$0xff]
        %v841 = vld [vmem:[%s399 + $0x8] sm:$0xff]
        %v842 = vld [vmem:[%s399 + $0x10] sm:$0xff]
        %v843 = vld [vmem:[%s399 + $0x18] sm:$0xff]
        %v844 = vld [vmem:[%s399 + $0x20] sm:$0xff]
        %v845 = vld [vmem:[%s399 + $0x28] sm:$0xff]
        %v846 = vld [vmem:[%s399 + $0x30] sm:$0xff]
        %v847 = vld [vmem:[%s399 + $0x38] sm:$0xff]
        %v848 = vld [vmem:[%s399 + $0x40] sm:$0xff]
        %v849 = vld [vmem:[%s399 + $0x48] sm:$0xff]
        %v850 = vld [vmem:[%s399 + $0x50] sm:$0xff]
        %v851 = vld [vmem:[%s399 + $0x58] sm:$0xff]
        %v852 = vld [vmem:[%s399 + $0x60] sm:$0xff]
        %v853 = vld [vmem:[%s399 + $0x68] sm:$0xff]
        %v854 = vld [vmem:[%s399 + $0x70] sm:$0xff]
        %v855 = vld [vmem:[%s399 + $0x78] sm:$0xff]
        %v856 = vld [vmem:[%s399 + $0x80] sm:$0xff]
        %v857 = vld [vmem:[%s399 + $0x88] sm:$0xff]
        %v858 = vld [vmem:[%s399 + $0x90] sm:$0xff]
        %v859 = vld [vmem:[%s399 + $0x98] sm:$0xff]
        %v860 = vld [vmem:[%s399 + $0xa0] sm:$0xff]
        %v861 = vld [vmem:[%s399 + $0xa8] sm:$0xff]
        %v862 = vld [vmem:[%s399 + $0xb0] sm:$0xff]
        %v863 = vld [vmem:[%s399 + $0xb8] sm:$0xff]
        %v864 = vld [vmem:[%s399 + $0xc0] sm:$0xff]
        %v865 = vld [vmem:[%s399 + $0xc8] sm:$0xff]
        %v866 = vld [vmem:[%s399 + $0xd0] sm:$0xff]
        %v867 = vld [vmem:[%s399 + $0xd8] sm:$0xff]
        %v868 = vld [vmem:[%s399 + $0xe0] sm:$0xff]
        %v869 = vld [vmem:[%s399 + $0xe8] sm:$0xff]
        %v870 = vld [vmem:[%s399 + $0xf0] sm:$0xff]
        %v871 = vld [vmem:[%s399 + $0xf8] sm:$0xff]
        %v904 = vunpack.c.l.b16 %v840
        %v905 = vunpack.c.h.b16 %v840
        %v906 = vunpack.c.l.b16 %v841
        %v907 = vunpack.c.h.b16 %v841
        %v908 = vunpack.c.l.b16 %v842
        %v909 = vunpack.c.h.b16 %v842
        %v910 = vunpack.c.l.b16 %v843
        %v911 = vunpack.c.h.b16 %v843
        %v912 = vunpack.c.l.b16 %v844
        %v913 = vunpack.c.h.b16 %v844
        %v914 = vunpack.c.l.b16 %v845
        %v915 = vunpack.c.h.b16 %v845
        %v916 = vunpack.c.l.b16 %v846
        %v917 = vunpack.c.h.b16 %v846
        %v918 = vunpack.c.l.b16 %v847
        %v919 = vunpack.c.h.b16 %v847
        %v920 = vunpack.c.l.b16 %v848
        %v921 = vunpack.c.h.b16 %v848
        %v922 = vunpack.c.l.b16 %v849
        %v923 = vunpack.c.h.b16 %v849
        %v924 = vunpack.c.l.b16 %v850
        %v925 = vunpack.c.h.b16 %v850
        %v926 = vunpack.c.l.b16 %v851
        %v927 = vunpack.c.h.b16 %v851
        %v928 = vunpack.c.l.b16 %v852
        %v929 = vunpack.c.h.b16 %v852
        %v930 = vunpack.c.l.b16 %v853
        %v931 = vunpack.c.h.b16 %v853
        %v932 = vunpack.c.l.b16 %v854
        %v933 = vunpack.c.h.b16 %v854
        %v934 = vunpack.c.l.b16 %v855
        %v935 = vunpack.c.h.b16 %v855
        %v936 = vunpack.c.l.b16 %v856
        %v937 = vunpack.c.h.b16 %v856
        %v938 = vunpack.c.l.b16 %v857
        %v939 = vunpack.c.h.b16 %v857
        %v940 = vunpack.c.l.b16 %v858
        %v941 = vunpack.c.h.b16 %v858
        %v942 = vunpack.c.l.b16 %v859
        %v943 = vunpack.c.h.b16 %v859
        %v944 = vunpack.c.l.b16 %v860
        %v945 = vunpack.c.h.b16 %v860
        %v946 = vunpack.c.l.b16 %v861
        %v947 = vunpack.c.h.b16 %v861
        %v948 = vunpack.c.l.b16 %v862
        %v949 = vunpack.c.h.b16 %v862
        %v950 = vunpack.c.l.b16 %v863
        %v951 = vunpack.c.h.b16 %v863
        %v952 = vunpack.c.l.b16 %v864
        %v953 = vunpack.c.h.b16 %v864
        %v954 = vunpack.c.l.b16 %v865
        %v955 = vunpack.c.h.b16 %v865
        %v956 = vunpack.c.l.b16 %v866
        %v957 = vunpack.c.h.b16 %v866
        %v958 = vunpack.c.l.b16 %v867
        %v959 = vunpack.c.h.b16 %v867
        %v960 = vunpack.c.l.b16 %v868
        %v961 = vunpack.c.h.b16 %v868
        %v962 = vunpack.c.l.b16 %v869
        %v963 = vunpack.c.h.b16 %v869
        %v964 = vunpack.c.l.b16 %v870
        %v965 = vunpack.c.h.b16 %v870
        %v966 = vunpack.c.l.b16 %v871
        %v967 = vunpack.c.h.b16 %v871
        %v968 = vpack.c.b16 %v908, %v904
        %v969 = vpack.c.b16 %v909, %v905
        %v970 = vpack.c.b16 %v910, %v906
        %v971 = vpack.c.b16 %v911, %v907
        %v972 = vpack.c.b16 %v916, %v912
        %v973 = vpack.c.b16 %v917, %v913
        %v974 = vpack.c.b16 %v918, %v914
        %v975 = vpack.c.b16 %v919, %v915
        %v976 = vpack.c.b16 %v924, %v920
        %v977 = vpack.c.b16 %v925, %v921
        %v978 = vpack.c.b16 %v926, %v922
        %v979 = vpack.c.b16 %v927, %v923
        %v980 = vpack.c.b16 %v932, %v928
        %v981 = vpack.c.b16 %v933, %v929
        %v982 = vpack.c.b16 %v934, %v930
        %v983 = vpack.c.b16 %v935, %v931
        %v984 = vpack.c.b16 %v940, %v936
        %v985 = vpack.c.b16 %v941, %v937
        %v986 = vpack.c.b16 %v942, %v938
        %v987 = vpack.c.b16 %v943, %v939
        %v988 = vpack.c.b16 %v948, %v944
        %v989 = vpack.c.b16 %v949, %v945
        %v990 = vpack.c.b16 %v950, %v946
        %v991 = vpack.c.b16 %v951, %v947
        %v992 = vpack.c.b16 %v956, %v952
        %v993 = vpack.c.b16 %v957, %v953
        %v994 = vpack.c.b16 %v958, %v954
        %v995 = vpack.c.b16 %v959, %v955
        %v996 = vpack.c.b16 %v964, %v960
        %v997 = vpack.c.b16 %v965, %v961
        %v998 = vpack.c.b16 %v966, %v962
        %v999 = vpack.c.b16 %v967, %v963
        %1032 = vmatprep.subr.bf16.mxu0 %v997
        %1033 = vmatpush1.bf16.msra.mxu0 %v996
        %1034 = vmatprep.subr.bf16.mxu0 %v993
        %1035 = vmatpush1.bf16.msra.mxu0 %v992
        %1036 = vmatprep.subr.bf16.mxu0 %v989
        %1037 = vmatpush1.bf16.msra.mxu0 %v988
        %1038 = vmatprep.subr.bf16.mxu0 %v985
        %1039 = vmatpush1.bf16.msra.mxu0 %v984
        %1040 = vmatprep.subr.bf16.mxu0 %v981
        %1041 = vmatpush1.bf16.msra.mxu0 %v980
        %1042 = vmatprep.subr.bf16.mxu0 %v977
        %1043 = vmatpush1.bf16.msra.mxu0 %v976
        %1044 = vmatprep.subr.bf16.mxu0 %v973
        %1045 = vmatpush1.bf16.msra.mxu0 %v972
        %1046 = vmatprep.subr.bf16.mxu0 %v969
        %1047 = vmatpush1.bf16.msra.mxu0 %v968
        %1048 = vmatprep.subr.bf16.mxu0 0
        %1049 = vmatpush2.bf16.msra.mxu0 0
        %1050 = vmatprep.subr.bf16.mxu0 0
        %1051 = vmatpush2.bf16.msra.mxu0 0
        %1052 = vmatprep.subr.bf16.mxu0 0
        %1053 = vmatpush2.bf16.msra.mxu0 0
        %1054 = vmatprep.subr.bf16.mxu0 0
        %1055 = vmatpush2.bf16.msra.mxu0 0
        %1056 = vmatprep.subr.bf16.mxu0 0
        %1057 = vmatpush2.bf16.msra.mxu0 0
        %1058 = vmatprep.subr.bf16.mxu0 0
        %1059 = vmatpush2.bf16.msra.mxu0 0
        %1060 = vmatprep.subr.bf16.mxu0 0
        %1061 = vmatpush2.bf16.msra.mxu0 0
        %1062 = vmatprep.subr.bf16.mxu0 0
        %1063 = vmatpush2.bf16.msra.mxu0 0
        %1064 = vmatprep.mubr.bf16.mxu0 0
        %1065 = vmatmul.mubr.bf16.gmra.mxu0 %v839
        %v1066 = vpop.f32.mrf.mxu0
        %v1067 = vadd.f32 0.0, %v1066
        %v1068 = vpop.f32.mrf.mxu0
        %v1069 = vadd.f32 0.0, %v1068
        %v1070 = vpop.f32.mrf.mxu0
        %v1071 = vpop.f32.mrf.mxu0
        %1072 = vdwg.mxu0
        %1073 = vmatprep.subr.bf16.mxu0 %v999
        %1074 = vmatpush1.bf16.msra.mxu0 %v998
        %1075 = vmatprep.subr.bf16.mxu0 %v995
        %1076 = vmatpush1.bf16.msra.mxu0 %v994
        %1077 = vmatprep.subr.bf16.mxu0 %v991
        %1078 = vmatpush1.bf16.msra.mxu0 %v990
        %1079 = vmatprep.subr.bf16.mxu0 %v987
        %1080 = vmatpush1.bf16.msra.mxu0 %v986
        %1081 = vmatprep.subr.bf16.mxu0 %v983
        %1082 = vmatpush1.bf16.msra.mxu0 %v982
        %1083 = vmatprep.subr.bf16.mxu0 %v979
        %1084 = vmatpush1.bf16.msra.mxu0 %v978
        %1085 = vmatprep.subr.bf16.mxu0 %v975
        %1086 = vmatpush1.bf16.msra.mxu0 %v974
        %1087 = vmatprep.subr.bf16.mxu0 %v971
        %1088 = vmatpush1.bf16.msra.mxu0 %v970
        %1089 = vmatprep.subr.bf16.mxu0 0
        %1090 = vmatpush2.bf16.msra.mxu0 0
        %1091 = vmatprep.subr.bf16.mxu0 0
        %1092 = vmatpush2.bf16.msra.mxu0 0
        %1093 = vmatprep.subr.bf16.mxu0 0
        %1094 = vmatpush2.bf16.msra.mxu0 0
        %1095 = vmatprep.subr.bf16.mxu0 0
        %1096 = vmatpush2.bf16.msra.mxu0 0
        %1097 = vmatprep.subr.bf16.mxu0 0
        %1098 = vmatpush2.bf16.msra.mxu0 0
        %1099 = vmatprep.subr.bf16.mxu0 0
        %1100 = vmatpush2.bf16.msra.mxu0 0
        %1101 = vmatprep.subr.bf16.mxu0 0
        %1102 = vmatpush2.bf16.msra.mxu0 0
        %1103 = vmatprep.subr.bf16.mxu0 0
        %1104 = vmatpush2.bf16.msra.mxu0 0
        %1105 = vmatprep.mubr.bf16.mxu0 0
        %1106 = vmatmul.mubr.bf16.gmra.mxu0 %v839
        %v1107 = vpop.f32.mrf.mxu0
        %v1108 = vadd.f32 0.0, %v1107
        %v1109 = vpop.f32.mrf.mxu0
        %v1110 = vadd.f32 0.0, %v1109
        %v1111 = vpop.f32.mrf.mxu0
        %v1112 = vpop.f32.mrf.mxu0
        %1113 = vdwg.mxu0
        %v1114 = vpack.c.bf16 %v1067, %v1067
        %v1115 = vpack.c.bf16 %v1069, %v1069
        %v1116 = vpack.c.bf16 %v1108, %v1108
        %v1117 = vpack.c.bf16 %v1110, %v1110
        %v1118 = vld [vmem:[#allocation3] sm:$0xf]
        %1119 = vmatprep.subr.bf16.mxu0 0
        %1120 = vmatpush1.bf16.xpose.msra.mxu0 0
        %1121 = vmatprep.subr.bf16.mxu0 0
        %1122 = vmatpush1.bf16.xpose.msra.mxu0 0
        %1123 = vmatprep.subr.bf16.mxu0 0
        %1124 = vmatpush1.bf16.xpose.msra.mxu0 0
        %1125 = vmatprep.subr.bf16.mxu0 0
        %1126 = vmatpush1.bf16.xpose.msra.mxu0 0
        %1127 = vmatprep.subr.bf16.mxu0 0
        %1128 = vmatpush1.bf16.xpose.msra.mxu0 0
        %1129 = vmatprep.subr.bf16.mxu0 0
        %1130 = vmatpush1.bf16.xpose.msra.mxu0 0
        %1131 = vmatprep.subr.bf16.mxu0 0
        %1132 = vmatpush1.bf16.xpose.msra.mxu0 0
        %1133 = vmatprep.subr.bf16.mxu0 0
        %1134 = vmatpush1.bf16.xpose.msra.mxu0 %v1118
        %1135 = vmatprep.subr.bf16.mxu0 0
        %1136 = vmatpush2.bf16.xpose.msra.mxu0 0
        %1137 = vmatprep.subr.bf16.mxu0 0
        %1138 = vmatpush2.bf16.xpose.msra.mxu0 0
        %1139 = vmatprep.subr.bf16.mxu0 0
        %1140 = vmatpush2.bf16.xpose.msra.mxu0 0
        %1141 = vmatprep.subr.bf16.mxu0 0
        %1142 = vmatpush2.bf16.xpose.msra.mxu0 0
        %1143 = vmatprep.subr.bf16.mxu0 0
        %1144 = vmatpush2.bf16.xpose.msra.mxu0 0
        %1145 = vmatprep.subr.bf16.mxu0 0
        %1146 = vmatpush2.bf16.xpose.msra.mxu0 0
        %1147 = vmatprep.subr.bf16.mxu0 0
        %1148 = vmatpush2.bf16.xpose.msra.mxu0 0
        %1149 = vmatprep.subr.bf16.mxu0 0
        %1150 = vmatpush2.bf16.xpose.msra.mxu0 0
        %1151 = vmatprep.mubr.bf16.mxu0 0
        %1152 = vmatmul.mubr.bf16.gmra.mxu0 %v1114
        %v1153 = vpop.f32.mrf.mxu0
        %v1154 = vadd.f32 0.0, %v1153
        %v1155 = vpop.f32.mrf.mxu0
        %v1156 = vpop.f32.mrf.mxu0
        %v1157 = vpop.f32.mrf.mxu0
        %1158 = vdwg.mxu0
        %v1159 = vpack.c.bf16 %v1154, %v1154
        %vm1160 = vcmask 60416
        %1161 = vst.msk [vmem:[%s445] sm:$0xf] %vm1160, %v1159
        %1162 = vmatprep.subr.bf16.mxu0 0
        %1163 = vmatpush1.bf16.xpose.msra.mxu0 0
        %1164 = vmatprep.subr.bf16.mxu0 0
        %1165 = vmatpush1.bf16.xpose.msra.mxu0 0
        %1166 = vmatprep.subr.bf16.mxu0 0
        %1167 = vmatpush1.bf16.xpose.msra.mxu0 0
        %1168 = vmatprep.subr.bf16.mxu0 0
        %1169 = vmatpush1.bf16.xpose.msra.mxu0 0
        %1170 = vmatprep.subr.bf16.mxu0 0
        %1171 = vmatpush1.bf16.xpose.msra.mxu0 0
        %1172 = vmatprep.subr.bf16.mxu0 0
        %1173 = vmatpush1.bf16.xpose.msra.mxu0 0
        %1174 = vmatprep.subr.bf16.mxu0 0
        %1175 = vmatpush1.bf16.xpose.msra.mxu0 0
        %1176 = vmatprep.subr.bf16.mxu0 0
        %1177 = vmatpush1.bf16.xpose.msra.mxu0 %v1118
        %1178 = vmatprep.subr.bf16.mxu0 0
        %1179 = vmatpush2.bf16.xpose.msra.mxu0 0
        %1180 = vmatprep.subr.bf16.mxu0 0
        %1181 = vmatpush2.bf16.xpose.msra.mxu0 0
        %1182 = vmatprep.subr.bf16.mxu0 0
        %1183 = vmatpush2.bf16.xpose.msra.mxu0 0
        %1184 = vmatprep.subr.bf16.mxu0 0
        %1185 = vmatpush2.bf16.xpose.msra.mxu0 0
        %1186 = vmatprep.subr.bf16.mxu0 0
        %1187 = vmatpush2.bf16.xpose.msra.mxu0 0
        %1188 = vmatprep.subr.bf16.mxu0 0
        %1189 = vmatpush2.bf16.xpose.msra.mxu0 0
        %1190 = vmatprep.subr.bf16.mxu0 0
        %1191 = vmatpush2.bf16.xpose.msra.mxu0 0
        %1192 = vmatprep.subr.bf16.mxu0 0
        %1193 = vmatpush2.bf16.xpose.msra.mxu0 0
        %1194 = vmatprep.mubr.bf16.mxu0 0
        %1195 = vmatmul.mubr.bf16.gmra.mxu0 %v1115
        %v1196 = vpop.f32.mrf.mxu0
        %v1197 = vadd.f32 0.0, %v1196
        %v1198 = vpop.f32.mrf.mxu0
        %v1199 = vpop.f32.mrf.mxu0
        %v1200 = vpop.f32.mrf.mxu0
        %1201 = vdwg.mxu0
        %v1202 = vpack.c.bf16 %v1197, %v1197
        %s1203 = scalar_lea.vmem %s445, 4 [#allocation14]
        %1204 = vst.msk [vmem:[%s1203] sm:$0xf] %vm1160, %v1202
        %1205 = vmatprep.subr.bf16.mxu0 0
        %1206 = vmatpush1.bf16.xpose.msra.mxu0 0
        %1207 = vmatprep.subr.bf16.mxu0 0
        %1208 = vmatpush1.bf16.xpose.msra.mxu0 0
        %1209 = vmatprep.subr.bf16.mxu0 0
        %1210 = vmatpush1.bf16.xpose.msra.mxu0 0
        %1211 = vmatprep.subr.bf16.mxu0 0
        %1212 = vmatpush1.bf16.xpose.msra.mxu0 0
        %1213 = vmatprep.subr.bf16.mxu0 0
        %1214 = vmatpush1.bf16.xpose.msra.mxu0 0
        %1215 = vmatprep.subr.bf16.mxu0 0
        %1216 = vmatpush1.bf16.xpose.msra.mxu0 0
        %1217 = vmatprep.subr.bf16.mxu0 0
        %1218 = vmatpush1.bf16.xpose.msra.mxu0 0
        %1219 = vmatprep.subr.bf16.mxu0 0
        %1220 = vmatpush1.bf16.xpose.msra.mxu0 %v1118
        %1221 = vmatprep.subr.bf16.mxu0 0
        %1222 = vmatpush2.bf16.xpose.msra.mxu0 0
        %1223 = vmatprep.subr.bf16.mxu0 0
        %1224 = vmatpush2.bf16.xpose.msra.mxu0 0
        %1225 = vmatprep.subr.bf16.mxu0 0
        %1226 = vmatpush2.bf16.xpose.msra.mxu0 0
        %1227 = vmatprep.subr.bf16.mxu0 0
        %1228 = vmatpush2.bf16.xpose.msra.mxu0 0
        %1229 = vmatprep.subr.bf16.mxu0 0
        %1230 = vmatpush2.bf16.xpose.msra.mxu0 0
        %1231 = vmatprep.subr.bf16.mxu0 0
        %1232 = vmatpush2.bf16.xpose.msra.mxu0 0
        %1233 = vmatprep.subr.bf16.mxu0 0
        %1234 = vmatpush2.bf16.xpose.msra.mxu0 0
        %1235 = vmatprep.subr.bf16.mxu0 0
        %1236 = vmatpush2.bf16.xpose.msra.mxu0 0
        %1237 = vmatprep.mubr.bf16.mxu0 0
        %1238 = vmatmul.mubr.bf16.gmra.mxu0 %v1116
        %v1239 = vpop.f32.mrf.mxu0
        %v1240 = vadd.f32 0.0, %v1239
        %v1241 = vpop.f32.mrf.mxu0
        %v1242 = vpop.f32.mrf.mxu0
        %v1243 = vpop.f32.mrf.mxu0
        %1244 = vdwg.mxu0
        %v1245 = vpack.c.bf16 %v1240, %v1240
        %s1246 = scalar_lea.vmem %s445, 8 [#allocation14]
        %1247 = vst.msk [vmem:[%s1246] sm:$0xf] %vm1160, %v1245
        %1248 = vmatprep.subr.bf16.mxu0 0
        %1249 = vmatpush1.bf16.xpose.msra.mxu0 0
        %1250 = vmatprep.subr.bf16.mxu0 0
        %1251 = vmatpush1.bf16.xpose.msra.mxu0 0
        %1252 = vmatprep.subr.bf16.mxu0 0
        %1253 = vmatpush1.bf16.xpose.msra.mxu0 0
        %1254 = vmatprep.subr.bf16.mxu0 0
        %1255 = vmatpush1.bf16.xpose.msra.mxu0 0
        %1256 = vmatprep.subr.bf16.mxu0 0
        %1257 = vmatpush1.bf16.xpose.msra.mxu0 0
        %1258 = vmatprep.subr.bf16.mxu0 0
        %1259 = vmatpush1.bf16.xpose.msra.mxu0 0
        %1260 = vmatprep.subr.bf16.mxu0 0
        %1261 = vmatpush1.bf16.xpose.msra.mxu0 0
        %1262 = vmatprep.subr.bf16.mxu0 0
        %1263 = vmatpush1.bf16.xpose.msra.mxu0 %v1118
        %1264 = vmatprep.subr.bf16.mxu0 0
        %1265 = vmatpush2.bf16.xpose.msra.mxu0 0
        %1266 = vmatprep.subr.bf16.mxu0 0
        %1267 = vmatpush2.bf16.xpose.msra.mxu0 0
        %1268 = vmatprep.subr.bf16.mxu0 0
        %1269 = vmatpush2.bf16.xpose.msra.mxu0 0
        %1270 = vmatprep.subr.bf16.mxu0 0
        %1271 = vmatpush2.bf16.xpose.msra.mxu0 0
        %1272 = vmatprep.subr.bf16.mxu0 0
        %1273 = vmatpush2.bf16.xpose.msra.mxu0 0
        %1274 = vmatprep.subr.bf16.mxu0 0
        %1275 = vmatpush2.bf16.xpose.msra.mxu0 0
        %1276 = vmatprep.subr.bf16.mxu0 0
        %1277 = vmatpush2.bf16.xpose.msra.mxu0 0
        %1278 = vmatprep.subr.bf16.mxu0 0
        %1279 = vmatpush2.bf16.xpose.msra.mxu0 0
        %1280 = vmatprep.mubr.bf16.mxu0 0
        %1281 = vmatmul.mubr.bf16.gmra.mxu0 %v1117
        %v1282 = vpop.f32.mrf.mxu0
        %v1283 = vadd.f32 0.0, %v1282
        %v1284 = vpop.f32.mrf.mxu0
        %v1285 = vpop.f32.mrf.mxu0
        %v1286 = vpop.f32.mrf.mxu0
        %1287 = vdwg.mxu0
        %v1288 = vpack.c.bf16 %v1283, %v1283
        %s1289 = scalar_lea.vmem %s445, 12 [#allocation14]
        %1290 = vst.msk [vmem:[%s1289] sm:$0xf] %vm1160, %v1288
        %s1291 = sand.u32 %s215, 1
        %s1292 = scalar_lea.sflag [#allocation6], %s1291
        %s1293 = sand.u32 %s215, 1
        %s1294 = smul.addr %s1293, 8
        %s1295 = scalar_lea.vmem [#allocation13], %s1294
        %s1296 = sand.u32 %s243, 1
        %s1297 = scalar_lea.sflag [#allocation15], %s1296
        %s1298 = sand.u32 %s243, 1
        %s1299 = smul.addr %s1298, 16
        %s1300 = scalar_lea.vmem [#allocation14], %s1299
        // Predicated region
        $region73: #{tpu_custom_call.1} parent=47 // pred_check
          %p1301 = pneg %p225
        $region74: #{tpu_custom_call.1} parent=47 // pred_check_branch
          %1303 = sbr.rel (%p1301) target = $region76
        $region75: #{tpu_custom_call.1} parent=47 // pred_region
          %s1305 = ssub.s32 128, 128
          %1306 = vsyncadd %s1292, %s1305
          %s1307 = smul.addr %s37, 128
          %s1308 = scalar_lea.hbm %s7, %s1307
          %s1310 = sshll.u32 %s1295, 4
          %s1311 = int_to_ptr.vmem [resolvable:$true] %s1310
          %1313 = dma.vmem_to_hbm [thread:$0]  %s1311, 128, %s1308, %s1292
        $region76: #{tpu_custom_call.1} parent=47 // pred_fallthru
          _
        // Predicated region
        $region77: #{tpu_custom_call.1} parent=47 // pred_check
          %p1314 = pneg %p253
        $region78: #{tpu_custom_call.1} parent=47 // pred_check_branch
          %1316 = sbr.rel (%p1314) target = $region80
        $region79: #{tpu_custom_call.1} parent=47 // pred_region
          %s1317 = smul.u32 4, %s38
          %s1319 = ssub.s32 256, 256
          %1320 = vsyncadd %s1297, %s1319
          %s1321 = smul.addr %s37, 8
          %s1322 = sadd.s32 %s1317, %s1321
          %s1323 = smul.addr %s1322, 64
          %s1324 = scalar_lea.hbm %s8, %s1323
          %s1325 = sshll.u32 %s1300, 4
          %s1326 = int_to_ptr.vmem [resolvable:$true] %s1325
          %1331 = dma.vmem_to_hbm [thread:$0]  %s1326, 256, %s1324, %s1297, 64, 64, 4
        $region80: #{tpu_custom_call.1} parent=47 // pred_fallthru
          _
      $region48: #{tpu_custom_call.1} parent=5 // pred_fallthru
        _
      %p1332 = scmp.le.s32.totalorder 2, %s28
      // Predicated region
      $region81: #{tpu_custom_call.1} parent=5 // pred_check
        %p1333 = pneg %p1332
      $region82: #{tpu_custom_call.1} parent=5 // pred_check_branch
        %1335 = sbr.rel (%p1333) target = $region84
      $region83: #{tpu_custom_call.1} parent=5 // pred_region
        %s1336 = ssub.s32 %s28, 2
        // Predicated region
        $region85: #{tpu_custom_call.1} parent=83 // pred_check
          %p1337 = pneg %p231
        $region86: #{tpu_custom_call.1} parent=83 // pred_check_branch
          %1339 = sbr.rel (%p1337) target = $region88
        $region87: #{tpu_custom_call.1} parent=83 // pred_region
          %s1340 = sand.u32 %s216, 1
          %s1341 = scalar_lea.sflag [#allocation6], %s1340
          %s1342 = sand.u32 %s216, 1
          %s1343 = smul.addr %s1342, 8
          %s1344 = scalar_lea.vmem [#allocation13], %s1343
          %1345 = dma.done %s1341, 128
        $region88: #{tpu_custom_call.1} parent=83 // pred_fallthru
          _
        // Predicated region
        $region89: #{tpu_custom_call.1} parent=83 // pred_check
          %p1346 = pneg %p259
        $region90: #{tpu_custom_call.1} parent=83 // pred_check_branch
          %1348 = sbr.rel (%p1346) target = $region92
        $region91: #{tpu_custom_call.1} parent=83 // pred_region
          %s1349 = sand.u32 %s244, 1
          %s1350 = scalar_lea.sflag [#allocation15], %s1349
          %s1351 = sand.u32 %s244, 1
          %s1352 = smul.addr %s1351, 16
          %s1353 = scalar_lea.vmem [#allocation14], %s1352
          %1354 = dma.done %s1350, 256
        $region92: #{tpu_custom_call.1} parent=83 // pred_fallthru
          _
      $region84: #{tpu_custom_call.1} parent=5 // pred_fallthru
        _
    $region6: #{tpu_custom_call.1} parent=1 // loop_footer
      %s32 = sadd.s32 1, %s28
    $region7: #{tpu_custom_call.1} parent=1 // loop_footer_branch
      %27 = sbr.rel target = $region3
    $region8: #{tpu_custom_call.1} parent=1 // loop_exit
      _
    %1355 = vsyncpa [#allocation5], 1
    %s1356 = scalar_lea.sflag [#allocation5], 1
    %1357 = vsyncpa %s1356, 1
    %1358 = vsyncpa [#allocation8], 1
    %s1359 = scalar_lea.sflag [#allocation8], 1
    %1360 = vsyncpa %s1359, 1
    %1361 = vsyncpa [#allocation11], 1
    %1362 = vsyncpa [#allocation6], 1
    %s1363 = scalar_lea.sflag [#allocation6], 1
    %1364 = vsyncpa %s1363, 1
    %1365 = vsyncpa [#allocation15], 1
    %s1366 = scalar_lea.sflag [#allocation15], 1
    %1367 = vsyncpa %s1366, 1

</llo_original>
